<compile_context>
chip_gen: v6e
topology: v6e:2x2x1
jax: 0.10.0
libtpu: 0.0.40
codegen_flags: <defaults>
</compile_context>

<pallas_src>
import numpy as np

import jax
import jax.numpy as jnp
from jax.experimental import pallas as pl
from jax.experimental.pallas import tpu as pltpu

_EPS = 1e-5


# ----------------------------------------------------------------------------
# In-kernel helpers
# ----------------------------------------------------------------------------
def _conv_rows(h, m_ref):
    """3x3 conv on a row-folded tile.

    h:     (R, W*C) f32 rows of ONE sample (W and C folded on the lane axis).
    m_ref: (3, W*C, W*C) bf16 folded conv operator (W zero-padding baked in).

    H zero-padding is applied by inserting a zero row when shifting (tile
    boundary == sample boundary). Three bf16 MXU matmuls, f32 accumulate.
    """
    R, WC = h.shape
    zero_row = jnp.zeros((1, WC), h.dtype)
    h_prev = jnp.concatenate([zero_row, h[:R - 1, :]], axis=0)   # h[r-1], 0-pad top
    h_next = jnp.concatenate([h[1:, :], zero_row], axis=0)       # h[r+1], 0-pad bottom

    y = jnp.dot(h_prev.astype(jnp.bfloat16), m_ref[0],
                preferred_element_type=jnp.float32)
    y += jnp.dot(h.astype(jnp.bfloat16), m_ref[1],
                 preferred_element_type=jnp.float32)
    y += jnp.dot(h_next.astype(jnp.bfloat16), m_ref[2],
                 preferred_element_type=jnp.float32)
    return y


def _write_stats(st_ref, y):
    """Single-pass BN statistics: per-tile sum and sum-of-squares over rows."""
    s0 = jnp.sum(y, axis=0, keepdims=True)        # (1, W*C)
    s1 = jnp.sum(y * y, axis=0, keepdims=True)    # (1, W*C)
    st_ref[...] = jnp.concatenate([s0, s1], axis=0).reshape(st_ref.shape)


# ----------------------------------------------------------------------------
# Kernels (3 passes; batch-wide BN forces the phase split)
# ----------------------------------------------------------------------------
def _conv1_stats_kernel(x_ref, m_ref, y_ref, st_ref):
    # conv1 (no bias: cancelled by BN) + BN1 partial statistics.
    y = _conv_rows(x_ref[...], m_ref)
    y_ref[...] = y
    _write_stats(st_ref, y)


def _bn_relu_conv2_stats_kernel(y1_ref, sc_ref, sh_ref, m_ref, y2_ref, st_ref):
    # BN1 affine + ReLU fused into the conv2 prologue; BN2 partial statistics.
    h = jnp.maximum(y1_ref[...] * sc_ref[...] + sh_ref[...], 0.0)
    y = _conv_rows(h, m_ref)
    y2_ref[...] = y
    _write_stats(st_ref, y)


def _bn2_residual_relu_kernel(x_ref, y2_ref, sc_ref, sh_ref, o_ref):
    # BN2 affine + residual add + final ReLU (all lane-dense elementwise).
    o_ref[...] = jnp.maximum(x_ref[...] + y2_ref[...] * sc_ref[...] + sh_ref[...],
                             0.0)


# ----------------------------------------------------------------------------
# Host-side helpers
# ----------------------------------------------------------------------------
def _fold_conv_weight(w_hwio, W):
    """(3,3,C,C) HWIO conv weight -> (3, W*C, W*C) row-folded operator (bf16).

    M[kh, wi*C + ci, wo*C + co] = w[kh, kw, ci, co] with wi = wo + kw - 1,
    zero where wi falls outside [0, W) (SAME padding along W baked in).
    """
    _, _, C, Co = w_hwio.shape
    P = np.zeros((3, W, W), np.float32)          # constant scatter pattern
    for kw in range(3):
        for wo in range(W):
            wi = wo + kw - 1
            if 0 <= wi < W:
                P[kw, wi, wo] = 1.0
    M = jnp.einsum("kab,skio->saibo", jnp.asarray(P), w_hwio)
    return M.reshape(3, W * C, W * Co).astype(jnp.bfloat16)


def _bn_affine(stats, gamma, beta, W, C, count):
    """Per-tile (sum, sumsq) -> folded per-channel BN scale/shift, (1, W*C)."""
    s = stats.sum(axis=0)                        # (2, W*C)
    s = s.reshape(2, W, C).sum(axis=1)           # (2, C)  per-channel
    mean = s[0] / count
    var = s[1] / count - mean * mean             # biased variance (training BN)
    scale = gamma * jax.lax.rsqrt(var + _EPS)
    shift = beta - mean * scale
    scale_f = jnp.tile(scale, W).reshape(1, W * C)
    shift_f = jnp.tile(shift, W).reshape(1, W * C)
    return scale_f, shift_f


# ----------------------------------------------------------------------------
# Wrapper
# ----------------------------------------------------------------------------
@jax.jit
def residual_block(x_nhwc, params):
    """x_nhwc: (N, H, W, C) f32. params = (w1, b1, g1, bt1, w2, b2, g2, bt2).

    w1, w2 are HWIO (3,3,C,C).  b1/b2 are accepted for interface parity with the
    PyTorch module but are not used: training-mode BN subtracts the batch mean,
    which cancels a per-channel constant bias exactly.
    """
    w1, _b1, g1, bt1, w2, _b2, g2, bt2 = params
    N, H, W, C = x_nhwc.shape
    WC = W * C
    assert WC % 128 == 0, "fold W*C to a multiple of 128 lanes for this kernel"
    assert H % 8 == 0, "H must be a multiple of 8 (sublane tiling)"
    count = N * H * W

    M1 = _fold_conv_weight(w1, W)                # (3, WC, WC) bf16
    M2 = _fold_conv_weight(w2, W)
    x_f = x_nhwc.reshape(N * H, WC)              # lane-dense row-folded slab

    row_spec = pl.BlockSpec((H, WC), lambda i: (i, 0))
    m_spec = pl.BlockSpec((3, WC, WC), lambda i: (0, 0, 0))
    vec_spec = pl.BlockSpec((1, WC), lambda i: (0, 0))
    stat_spec = pl.BlockSpec((1, 2, WC), lambda i: (i, 0, 0))

    cparams = pltpu.CompilerParams(
        dimension_semantics=("parallel",),
        vmem_limit_bytes=32 * 1024 * 1024,
    )

    # Pass 1: conv1 + BN1 partial stats.
    y1_f, st1 = pl.pallas_call(
        _conv1_stats_kernel,
        out_shape=(jax.ShapeDtypeStruct((N * H, WC), jnp.float32),
                   jax.ShapeDtypeStruct((N, 2, WC), jnp.float32)),
        grid_spec=pltpu.PrefetchScalarGridSpec(
            num_scalar_prefetch=0, grid=(N,),
            in_specs=[row_spec, m_spec],
            out_specs=[row_spec, stat_spec]),
        compiler_params=cparams,
    )(x_f, M1)

    sc1, sh1 = _bn_affine(st1, g1, bt1, W, C, count)

    # Pass 2: BN1 + ReLU + conv2 + BN2 partial stats.
    y2_f, st2 = pl.pallas_call(
        _bn_relu_conv2_stats_kernel,
        out_shape=(jax.ShapeDtypeStruct((N * H, WC), jnp.float32),
                   jax.ShapeDtypeStruct((N, 2, WC), jnp.float32)),
        grid_spec=pltpu.PrefetchScalarGridSpec(
            num_scalar_prefetch=0, grid=(N,),
            in_specs=[row_spec, vec_spec, vec_spec, m_spec],
            out_specs=[row_spec, stat_spec]),
        compiler_params=cparams,
    )(y1_f, sc1, sh1, M2)

    sc2, sh2 = _bn_affine(st2, g2, bt2, W, C, count)

    # Pass 3: BN2 + residual add + final ReLU.
    out_f = pl.pallas_call(
        _bn2_residual_relu_kernel,
        out_shape=jax.ShapeDtypeStruct((N * H, WC), jnp.float32),
        grid_spec=pltpu.PrefetchScalarGridSpec(
            num_scalar_prefetch=0, grid=(N,),
            in_specs=[row_spec, row_spec, vec_spec, vec_spec],
            out_specs=row_spec),
        compiler_params=cparams,
    )(x_f, y2_f, sc2, sh2)

    return out_f.reshape(N, H, W, C)


# ----------------------------------------------------------------------------
# Plain-JAX reference (matches the PyTorch forward in training-mode BN)
# ----------------------------------------------------------------------------
def _reference(x_nhwc, params):
    w1, b1, g1, bt1, w2, b2, g2, bt2 = params

    def conv(x, w, b):
        y = jax.lax.conv_general_dilated(
            x, w, window_strides=(1, 1), padding="SAME",
            dimension_numbers=("NHWC", "HWIO", "NHWC"),
            precision=jax.lax.Precision.HIGHEST)
        return y + b.reshape(1, 1, 1, -1)

    def bn(y, g, bt):
        mean = jnp.mean(y, axis=(0, 1, 2), keepdims=True)
        var = jnp.mean((y - mean) ** 2, axis=(0, 1, 2), keepdims=True)
        return (y - mean) * jax.lax.rsqrt(var + _EPS) * g.reshape(1, 1, 1, -1) \
               + bt.reshape(1, 1, 1, -1)

    h = jax.nn.relu(bn(conv(x_nhwc, w1, b1), g1, bt1))
    h = bn(conv(h, w2, b2), g2, bt2)
    return jax.nn.relu(x_nhwc + h)


if __name__ == "__main__":
    # ResidualBlock(channel=8) on an NCHW (2, 8, 16, 16) input -> W*C = 128 lanes.
    N, C, H, W = 2, 8, 16, 16
    key = jax.random.PRNGKey(0)
    ks = jax.random.split(key, 9)

    x_nchw = jax.random.normal(ks[0], (N, C, H, W), jnp.float32)
    x_nhwc = jnp.transpose(x_nchw, (0, 2, 3, 1))

    # Conv weights in PyTorch layout (O, I, 3, 3) -> HWIO for the kernel/reference.
    w1_oihw = 0.1 * jax.random.normal(ks[1], (C, C, 3, 3), jnp.float32)
    w2_oihw = 0.1 * jax.random.normal(ks[2], (C, C, 3, 3), jnp.float32)
    w1 = jnp.transpose(w1_oihw, (2, 3, 1, 0))
    w2 = jnp.transpose(w2_oihw, (2, 3, 1, 0))
    b1 = 0.05 * jax.random.normal(ks[3], (C,), jnp.float32)
    b2 = 0.05 * jax.random.normal(ks[4], (C,), jnp.float32)
    g1 = 1.0 + 0.1 * jax.random.normal(ks[5], (C,), jnp.float32)
    bt1 = 0.1 * jax.random.normal(ks[6], (C,), jnp.float32)
    g2 = 1.0 + 0.1 * jax.random.normal(ks[7], (C,), jnp.float32)
    bt2 = 0.1 * jax.random.normal(ks[8], (C,), jnp.float32)

    params = (w1, b1, g1, bt1, w2, b2, g2, bt2)

    out = residual_block(x_nhwc, params)
    out = jax.block_until_ready(out)

    ref = _reference(x_nhwc, params)
    err = float(jnp.max(jnp.abs(out - ref)))
    assert out.shape == (N, H, W, C)
    # Looser tolerance than the f32 version: conv operands are bf16 on the MXU.
    assert err < 5e-2, err

    print("KERNEL_OK")
</pallas_src>

<mosaic_0001>
module attributes {stable_mosaic.version = 11 : i64} {
  func.func @_conv1_stats_kernel(%arg0: i32, %arg1: memref<16x128xf32, #tpu.memory_space<vmem>>, %arg2: memref<3x128x128xbf16, #tpu.memory_space<vmem>>, %arg3: memref<16x128xf32, #tpu.memory_space<vmem>>, %arg4: memref<1x2x128xf32, #tpu.memory_space<vmem>>) attributes {dimension_semantics = [#tpu.dimension_semantics<parallel>], iteration_bounds = array<i64: 2>, scalar_prefetch = 0 : i64, scratch_operands = 0 : i64, tpu.core_type = #tpu.core_type<tc>, window_params = [{transform_indices = @transform_0, window_bounds = array<i64: 16, 128>}, {pipeline_mode = #tpu.pipeline_mode<synchronous>, transform_indices = @transform_1, window_bounds = array<i64: 3, 128, 128>}, {transform_indices = @transform_2, window_bounds = array<i64: 16, 128>}, {transform_indices = @transform_3, window_bounds = array<i64: 1, 2, 128>}]} {
    %c0 = arith.constant 0 : index
    %c0_0 = arith.constant 0 : index
    %0 = vector.load %arg1[%c0, %c0_0] : memref<16x128xf32, #tpu.memory_space<vmem>>, vector<16x128xf32>
    %cst = arith.constant 0.000000e+00 : f32
    %1 = vector.broadcast %cst : f32 to vector<1x128xf32>
    %2 = vector.extract_strided_slice %0 {offsets = [0, 0], sizes = [15, 128], strides = [1, 1]} : vector<16x128xf32> to vector<15x128xf32>
    %3 = tpu.concatenate %1, %2 in 0 : vector<1x128xf32>, vector<15x128xf32> -> vector<16x128xf32>
    %4 = vector.extract_strided_slice %0 {offsets = [1, 0], sizes = [15, 128], strides = [1, 1]} : vector<16x128xf32> to vector<15x128xf32>
    %5 = tpu.concatenate %4, %1 in 0 : vector<15x128xf32>, vector<1x128xf32> -> vector<16x128xf32>
    %6 = arith.truncf %3 : vector<16x128xf32> to vector<16x128xbf16>
    %c0_1 = arith.constant 0 : index
    %c0_2 = arith.constant 0 : index
    %c0_3 = arith.constant 0 : index
    %7 = vector.load %arg2[%c0_1, %c0_2, %c0_3] : memref<3x128x128xbf16, #tpu.memory_space<vmem>>, vector<1x128x128xbf16>
    %8 = vector.shape_cast %7 : vector<1x128x128xbf16> to vector<128x128xbf16>
    %cst_4 = arith.constant dense<0.000000e+00> : vector<16x128xf32>
    %9 = tpu.matmul %6, %8, %cst_4 {dimension_numbers = #tpu.dot_dimension_numbers<[1], [0], [0], [1], [0, 0, 1, 1], [], []>} : vector<16x128xbf16>, vector<128x128xbf16>, vector<16x128xf32> -> vector<16x128xf32>
    %10 = arith.truncf %0 : vector<16x128xf32> to vector<16x128xbf16>
    %c1 = arith.constant 1 : index
    %c0_5 = arith.constant 0 : index
    %c0_6 = arith.constant 0 : index
    %11 = vector.load %arg2[%c1, %c0_5, %c0_6] : memref<3x128x128xbf16, #tpu.memory_space<vmem>>, vector<1x128x128xbf16>
    %12 = vector.shape_cast %11 : vector<1x128x128xbf16> to vector<128x128xbf16>
    %cst_7 = arith.constant dense<0.000000e+00> : vector<16x128xf32>
    %13 = tpu.matmul %10, %12, %cst_7 {dimension_numbers = #tpu.dot_dimension_numbers<[1], [0], [0], [1], [0, 0, 1, 1], [], []>} : vector<16x128xbf16>, vector<128x128xbf16>, vector<16x128xf32> -> vector<16x128xf32>
    %14 = arith.addf %9, %13 : vector<16x128xf32>
    %15 = arith.truncf %5 : vector<16x128xf32> to vector<16x128xbf16>
    %c2 = arith.constant 2 : index
    %c0_8 = arith.constant 0 : index
    %c0_9 = arith.constant 0 : index
    %16 = vector.load %arg2[%c2, %c0_8, %c0_9] : memref<3x128x128xbf16, #tpu.memory_space<vmem>>, vector<1x128x128xbf16>
    %17 = vector.shape_cast %16 : vector<1x128x128xbf16> to vector<128x128xbf16>
    %cst_10 = arith.constant dense<0.000000e+00> : vector<16x128xf32>
    %18 = tpu.matmul %15, %17, %cst_10 {dimension_numbers = #tpu.dot_dimension_numbers<[1], [0], [0], [1], [0, 0, 1, 1], [], []>} : vector<16x128xbf16>, vector<128x128xbf16>, vector<16x128xf32> -> vector<16x128xf32>
    %19 = arith.addf %14, %18 : vector<16x128xf32>
    %c0_11 = arith.constant 0 : index
    %c0_12 = arith.constant 0 : index
    %20 = vector.load %arg3[%c0_11, %c0_12] : memref<16x128xf32, #tpu.memory_space<vmem>>, vector<16x128xf32>
    tpu.vector_store %arg3[%c0_11, %c0_12], %19 {strides = array<i32>} : memref<16x128xf32, #tpu.memory_space<vmem>>, vector<16x128xf32>,
    %cst_13 = arith.constant dense<0.000000e+00> : vector<128xf32>
    %21 = vector.multi_reduction <add>, %19, %cst_13 [0] : vector<16x128xf32> to vector<128xf32>
    %22 = vector.shape_cast %21 : vector<128xf32> to vector<1x128xf32>
    %23 = arith.mulf %19, %19 : vector<16x128xf32>
    %cst_14 = arith.constant dense<0.000000e+00> : vector<128xf32>
    %24 = vector.multi_reduction <add>, %23, %cst_14 [0] : vector<16x128xf32> to vector<128xf32>
    %25 = vector.shape_cast %24 : vector<128xf32> to vector<1x128xf32>
    %26 = tpu.concatenate %22, %25 in 0 : vector<1x128xf32>, vector<1x128xf32> -> vector<2x128xf32>
    %27 = vector.shape_cast %26 : vector<2x128xf32> to vector<1x2x128xf32>
    %c0_15 = arith.constant 0 : index
    %c0_16 = arith.constant 0 : index
    %c0_17 = arith.constant 0 : index
    %28 = vector.load %arg4[%c0_15, %c0_16, %c0_17] : memref<1x2x128xf32, #tpu.memory_space<vmem>>, vector<1x2x128xf32>
    tpu.vector_store %arg4[%c0_15, %c0_16, %c0_17], %27 {strides = array<i32>} : memref<1x2x128xf32, #tpu.memory_space<vmem>>, vector<1x2x128xf32>,
    return
  }
  func.func @transform_0(%arg0: i32) -> (i32, i32) {
    %c0_i32 = arith.constant 0 : i32
    %c0_i32_0 = arith.constant 0 : i32
    return %arg0, %c0_i32 : i32, i32
  }
  func.func @transform_1(%arg0: i32) -> (i32, i32, i32) {
    %c0_i32 = arith.constant 0 : i32
    %c0_i32_0 = arith.constant 0 : i32
    %c0_i32_1 = arith.constant 0 : i32
    %c0_i32_2 = arith.constant 0 : i32
    return %c0_i32, %c0_i32_0, %c0_i32_1 : i32, i32, i32
  }
  func.func @transform_2(%arg0: i32) -> (i32, i32) {
    %c0_i32 = arith.constant 0 : i32
    %c0_i32_0 = arith.constant 0 : i32
    return %arg0, %c0_i32 : i32, i32
  }
  func.func @transform_3(%arg0: i32) -> (i32, i32, i32) {
    %c0_i32 = arith.constant 0 : i32
    %c0_i32_0 = arith.constant 0 : i32
    %c0_i32_1 = arith.constant 0 : i32
    return %arg0, %c0_i32, %c0_i32_0 : i32, i32, i32
  }
}

module attributes {stable_mosaic.version = 11 : i64} {
  func.func @_bn_relu_conv2_stats_kernel(%arg0: i32, %arg1: memref<16x128xf32, #tpu.memory_space<vmem>>, %arg2: memref<1x128xf32, #tpu.memory_space<vmem>>, %arg3: memref<1x128xf32, #tpu.memory_space<vmem>>, %arg4: memref<3x128x128xbf16, #tpu.memory_space<vmem>>, %arg5: memref<16x128xf32, #tpu.memory_space<vmem>>, %arg6: memref<1x2x128xf32, #tpu.memory_space<vmem>>) attributes {dimension_semantics = [#tpu.dimension_semantics<parallel>], iteration_bounds = array<i64: 2>, scalar_prefetch = 0 : i64, scratch_operands = 0 : i64, tpu.core_type = #tpu.core_type<tc>, window_params = [{transform_indices = @transform_0, window_bounds = array<i64: 16, 128>}, {pipeline_mode = #tpu.pipeline_mode<synchronous>, transform_indices = @transform_1, window_bounds = array<i64: 1, 128>}, {pipeline_mode = #tpu.pipeline_mode<synchronous>, transform_indices = @transform_2, window_bounds = array<i64: 1, 128>}, {pipeline_mode = #tpu.pipeline_mode<synchronous>, transform_indices = @transform_3, window_bounds = array<i64: 3, 128, 128>}, {transform_indices = @transform_4, window_bounds = array<i64: 16, 128>}, {transform_indices = @transform_5, window_bounds = array<i64: 1, 2, 128>}]} {
    %c0 = arith.constant 0 : index
    %c0_0 = arith.constant 0 : index
    %0 = vector.load %arg1[%c0, %c0_0] : memref<16x128xf32, #tpu.memory_space<vmem>>, vector<16x128xf32>
    %c0_1 = arith.constant 0 : index
    %c0_2 = arith.constant 0 : index
    %1 = vector.load %arg2[%c0_1, %c0_2] : memref<1x128xf32, #tpu.memory_space<vmem>>, vector<1x128xf32>
    %2 = vector.broadcast %1 : vector<1x128xf32> to vector<16x128xf32>
    %3 = arith.mulf %0, %2 : vector<16x128xf32>
    %c0_3 = arith.constant 0 : index
    %c0_4 = arith.constant 0 : index
    %4 = vector.load %arg3[%c0_3, %c0_4] : memref<1x128xf32, #tpu.memory_space<vmem>>, vector<1x128xf32>
    %5 = vector.broadcast %4 : vector<1x128xf32> to vector<16x128xf32>
    %6 = arith.addf %3, %5 : vector<16x128xf32>
    %cst = arith.constant 0.000000e+00 : f32
    %7 = vector.broadcast %cst : f32 to vector<16x128xf32>
    %8 = arith.maximumf %6, %7 : vector<16x128xf32>
    %cst_5 = arith.constant 0.000000e+00 : f32
    %9 = vector.broadcast %cst_5 : f32 to vector<1x128xf32>
    %10 = vector.extract_strided_slice %8 {offsets = [0, 0], sizes = [15, 128], strides = [1, 1]} : vector<16x128xf32> to vector<15x128xf32>
    %11 = tpu.concatenate %9, %10 in 0 : vector<1x128xf32>, vector<15x128xf32> -> vector<16x128xf32>
    %12 = vector.extract_strided_slice %8 {offsets = [1, 0], sizes = [15, 128], strides = [1, 1]} : vector<16x128xf32> to vector<15x128xf32>
    %13 = tpu.concatenate %12, %9 in 0 : vector<15x128xf32>, vector<1x128xf32> -> vector<16x128xf32>
    %14 = arith.truncf %11 : vector<16x128xf32> to vector<16x128xbf16>
    %c0_6 = arith.constant 0 : index
    %c0_7 = arith.constant 0 : index
    %c0_8 = arith.constant 0 : index
    %15 = vector.load %arg4[%c0_6, %c0_7, %c0_8] : memref<3x128x128xbf16, #tpu.memory_space<vmem>>, vector<1x128x128xbf16>
    %16 = vector.shape_cast %15 : vector<1x128x128xbf16> to vector<128x128xbf16>
    %cst_9 = arith.constant dense<0.000000e+00> : vector<16x128xf32>
    %17 = tpu.matmul %14, %16, %cst_9 {dimension_numbers = #tpu.dot_dimension_numbers<[1], [0], [0], [1], [0, 0, 1, 1], [], []>} : vector<16x128xbf16>, vector<128x128xbf16>, vector<16x128xf32> -> vector<16x128xf32>
    %18 = arith.truncf %8 : vector<16x128xf32> to vector<16x128xbf16>
    %c1 = arith.constant 1 : index
    %c0_10 = arith.constant 0 : index
    %c0_11 = arith.constant 0 : index
    %19 = vector.load %arg4[%c1, %c0_10, %c0_11] : memref<3x128x128xbf16, #tpu.memory_space<vmem>>, vector<1x128x128xbf16>
    %20 = vector.shape_cast %19 : vector<1x128x128xbf16> to vector<128x128xbf16>
    %cst_12 = arith.constant dense<0.000000e+00> : vector<16x128xf32>
    %21 = tpu.matmul %18, %20, %cst_12 {dimension_numbers = #tpu.dot_dimension_numbers<[1], [0], [0], [1], [0, 0, 1, 1], [], []>} : vector<16x128xbf16>, vector<128x128xbf16>, vector<16x128xf32> -> vector<16x128xf32>
    %22 = arith.addf %17, %21 : vector<16x128xf32>
    %23 = arith.truncf %13 : vector<16x128xf32> to vector<16x128xbf16>
    %c2 = arith.constant 2 : index
    %c0_13 = arith.constant 0 : index
    %c0_14 = arith.constant 0 : index
    %24 = vector.load %arg4[%c2, %c0_13, %c0_14] : memref<3x128x128xbf16, #tpu.memory_space<vmem>>, vector<1x128x128xbf16>
    %25 = vector.shape_cast %24 : vector<1x128x128xbf16> to vector<128x128xbf16>
    %cst_15 = arith.constant dense<0.000000e+00> : vector<16x128xf32>
    %26 = tpu.matmul %23, %25, %cst_15 {dimension_numbers = #tpu.dot_dimension_numbers<[1], [0], [0], [1], [0, 0, 1, 1], [], []>} : vector<16x128xbf16>, vector<128x128xbf16>, vector<16x128xf32> -> vector<16x128xf32>
    %27 = arith.addf %22, %26 : vector<16x128xf32>
    %c0_16 = arith.constant 0 : index
    %c0_17 = arith.constant 0 : index
    %28 = vector.load %arg5[%c0_16, %c0_17] : memref<16x128xf32, #tpu.memory_space<vmem>>, vector<16x128xf32>
    tpu.vector_store %arg5[%c0_16, %c0_17], %27 {strides = array<i32>} : memref<16x128xf32, #tpu.memory_space<vmem>>, vector<16x128xf32>,
    %cst_18 = arith.constant dense<0.000000e+00> : vector<128xf32>
    %29 = vector.multi_reduction <add>, %27, %cst_18 [0] : vector<16x128xf32> to vector<128xf32>
    %30 = vector.shape_cast %29 : vector<128xf32> to vector<1x128xf32>
    %31 = arith.mulf %27, %27 : vector<16x128xf32>
    %cst_19 = arith.constant dense<0.000000e+00> : vector<128xf32>
    %32 = vector.multi_reduction <add>, %31, %cst_19 [0] : vector<16x128xf32> to vector<128xf32>
    %33 = vector.shape_cast %32 : vector<128xf32> to vector<1x128xf32>
    %34 = tpu.concatenate %30, %33 in 0 : vector<1x128xf32>, vector<1x128xf32> -> vector<2x128xf32>
    %35 = vector.shape_cast %34 : vector<2x128xf32> to vector<1x2x128xf32>
    %c0_20 = arith.constant 0 : index
    %c0_21 = arith.constant 0 : index
    %c0_22 = arith.constant 0 : index
    %36 = vector.load %arg6[%c0_20, %c0_21, %c0_22] : memref<1x2x128xf32, #tpu.memory_space<vmem>>, vector<1x2x128xf32>
    tpu.vector_store %arg6[%c0_20, %c0_21, %c0_22], %35 {strides = array<i32>} : memref<1x2x128xf32, #tpu.memory_space<vmem>>, vector<1x2x128xf32>,
    return
  }
  func.func @transform_0(%arg0: i32) -> (i32, i32) {
    %c0_i32 = arith.constant 0 : i32
    %c0_i32_0 = arith.constant 0 : i32
    return %arg0, %c0_i32 : i32, i32
  }
  func.func @transform_1(%arg0: i32) -> (i32, i32) {
    %c0_i32 = arith.constant 0 : i32
    %c0_i32_0 = arith.constant 0 : i32
    %c0_i32_1 = arith.constant 0 : i32
    return %c0_i32, %c0_i32_0 : i32, i32
  }
  func.func @transform_2(%arg0: i32) -> (i32, i32) {
    %c0_i32 = arith.constant 0 : i32
    %c0_i32_0 = arith.constant 0 : i32
    %c0_i32_1 = arith.constant 0 : i32
    return %c0_i32, %c0_i32_0 : i32, i32
  }
  func.func @transform_3(%arg0: i32) -> (i32, i32, i32) {
    %c0_i32 = arith.constant 0 : i32
    %c0_i32_0 = arith.constant 0 : i32
    %c0_i32_1 = arith.constant 0 : i32
    %c0_i32_2 = arith.constant 0 : i32
    return %c0_i32, %c0_i32_0, %c0_i32_1 : i32, i32, i32
  }
  func.func @transform_4(%arg0: i32) -> (i32, i32) {
    %c0_i32 = arith.constant 0 : i32
    %c0_i32_0 = arith.constant 0 : i32
    return %arg0, %c0_i32 : i32, i32
  }
  func.func @transform_5(%arg0: i32) -> (i32, i32, i32) {
    %c0_i32 = arith.constant 0 : i32
    %c0_i32_0 = arith.constant 0 : i32
    %c0_i32_1 = arith.constant 0 : i32
    return %arg0, %c0_i32, %c0_i32_0 : i32, i32, i32
  }
}

module attributes {stable_mosaic.version = 11 : i64} {
  func.func @_bn2_residual_relu_kernel(%arg0: i32, %arg1: memref<16x128xf32, #tpu.memory_space<vmem>>, %arg2: memref<16x128xf32, #tpu.memory_space<vmem>>, %arg3: memref<1x128xf32, #tpu.memory_space<vmem>>, %arg4: memref<1x128xf32, #tpu.memory_space<vmem>>, %arg5: memref<16x128xf32, #tpu.memory_space<vmem>>) attributes {dimension_semantics = [#tpu.dimension_semantics<parallel>], iteration_bounds = array<i64: 2>, scalar_prefetch = 0 : i64, scratch_operands = 0 : i64, tpu.core_type = #tpu.core_type<tc>, window_params = [{transform_indices = @transform_0, window_bounds = array<i64: 16, 128>}, {transform_indices = @transform_1, window_bounds = array<i64: 16, 128>}, {pipeline_mode = #tpu.pipeline_mode<synchronous>, transform_indices = @transform_2, window_bounds = array<i64: 1, 128>}, {pipeline_mode = #tpu.pipeline_mode<synchronous>, transform_indices = @transform_3, window_bounds = array<i64: 1, 128>}, {transform_indices = @transform_4, window_bounds = array<i64: 16, 128>}]} {
    %c0 = arith.constant 0 : index
    %c0_0 = arith.constant 0 : index
    %0 = vector.load %arg1[%c0, %c0_0] : memref<16x128xf32, #tpu.memory_space<vmem>>, vector<16x128xf32>
    %c0_1 = arith.constant 0 : index
    %c0_2 = arith.constant 0 : index
    %1 = vector.load %arg2[%c0_1, %c0_2] : memref<16x128xf32, #tpu.memory_space<vmem>>, vector<16x128xf32>
    %c0_3 = arith.constant 0 : index
    %c0_4 = arith.constant 0 : index
    %2 = vector.load %arg3[%c0_3, %c0_4] : memref<1x128xf32, #tpu.memory_space<vmem>>, vector<1x128xf32>
    %3 = vector.broadcast %2 : vector<1x128xf32> to vector<16x128xf32>
    %4 = arith.mulf %1, %3 : vector<16x128xf32>
    %5 = arith.addf %0, %4 : vector<16x128xf32>
    %c0_5 = arith.constant 0 : index
    %c0_6 = arith.constant 0 : index
    %6 = vector.load %arg4[%c0_5, %c0_6] : memref<1x128xf32, #tpu.memory_space<vmem>>, vector<1x128xf32>
    %7 = vector.broadcast %6 : vector<1x128xf32> to vector<16x128xf32>
    %8 = arith.addf %5, %7 : vector<16x128xf32>
    %cst = arith.constant 0.000000e+00 : f32
    %9 = vector.broadcast %cst : f32 to vector<16x128xf32>
    %10 = arith.maximumf %8, %9 : vector<16x128xf32>
    %c0_7 = arith.constant 0 : index
    %c0_8 = arith.constant 0 : index
    %11 = vector.load %arg5[%c0_7, %c0_8] : memref<16x128xf32, #tpu.memory_space<vmem>>, vector<16x128xf32>
    tpu.vector_store %arg5[%c0_7, %c0_8], %10 {strides = array<i32>} : memref<16x128xf32, #tpu.memory_space<vmem>>, vector<16x128xf32>,
    return
  }
  func.func @transform_0(%arg0: i32) -> (i32, i32) {
    %c0_i32 = arith.constant 0 : i32
    %c0_i32_0 = arith.constant 0 : i32
    return %arg0, %c0_i32 : i32, i32
  }
  func.func @transform_1(%arg0: i32) -> (i32, i32) {
    %c0_i32 = arith.constant 0 : i32
    %c0_i32_0 = arith.constant 0 : i32
    return %arg0, %c0_i32 : i32, i32
  }
  func.func @transform_2(%arg0: i32) -> (i32, i32) {
    %c0_i32 = arith.constant 0 : i32
    %c0_i32_0 = arith.constant 0 : i32
    %c0_i32_1 = arith.constant 0 : i32
    return %c0_i32, %c0_i32_0 : i32, i32
  }
  func.func @transform_3(%arg0: i32) -> (i32, i32) {
    %c0_i32 = arith.constant 0 : i32
    %c0_i32_0 = arith.constant 0 : i32
    %c0_i32_1 = arith.constant 0 : i32
    return %c0_i32, %c0_i32_0 : i32, i32
  }
  func.func @transform_4(%arg0: i32) -> (i32, i32) {
    %c0_i32 = arith.constant 0 : i32
    %c0_i32_0 = arith.constant 0 : i32
    return %arg0, %c0_i32 : i32, i32
  }
}

</mosaic_0001>

<llo_original>
// kernel: tile.28
$region0: #{tile.28}
  #allocation0 [shape = 's32[1]{0}', space=sflag, size = 0x4, scoped, tag = 'scoped memory for tile.28']
  %s0 = inlined_call_operand.vmem [shape: f32[8], index: 0, kind: input, shape index: {}]
  %s1 = inlined_call_operand.vmem [shape: f32[16,8], index: 1, kind: output, shape index: {}]
  // Predicated region
  $region2: #{tile.28} parent=0 // pred_check
    _
  $region3: #{tile.28} parent=0 // pred_check_branch
    %3 = sbr.rel (0) target = $region5
  $region4: #{tile.28} parent=0 // pred_region
    _
  $region5: #{tile.28} parent=0 // pred_fallthru
    _
  %v4 = vld [vmem:[%s0] ss:$0 sm:$0xff]
  %5 = vst [vmem:[%s1] sm:$0xff] %v4
  %s6 = scalar_lea.vmem %s1, 8
  %7 = vst [vmem:[%s6] sm:$0xff] %v4

// kernel: tile.29
$region0: #{tile.29}
  %s0 = inlined_call_operand.vmem [shape: f32[16,8], index: 0, kind: input, shape index: {}]
  %s1 = inlined_call_operand.vmem [shape: f32[1,128], index: 1, kind: output, shape index: {}]
  $region1: #{tile.29} parent=0
    #allocation0 [shape = 'u8[4096]{0}', space=vmem, size = 0x1000, scoped, tag = 'scoped mem for output reshape']
    %v2 = vld [vmem:[%s0] sm:$0x1]
    %vm3 = vcmask 64512
    %4 = vst.msk [vmem:[#allocation0] sm:$0x1] %vm3, %v2
    %s5 = scalar_lea.vmem %s0, 15
    %v6 = vld [vmem:[%s5] sm:$0x1]
    %7 = vrot.lane.b32.xlu0 %v6, 120
    %v8 = vpop.permute.xlu0 %7
    %vm9 = vcmask 1048512
    %10 = vst.msk [vmem:[#allocation0] sm:$0x1] %vm9, %v8
    %s11 = scalar_lea.vmem %s0, 14
    %v12 = vld [vmem:[%s11] sm:$0x1]
    %13 = vrot.lane.b32.xlu0 %v12, 112
    %v14 = vpop.permute.xlu0 %13
    %vm15 = vcmask 982912
    %16 = vst.msk [vmem:[#allocation0] sm:$0x1] %vm15, %v14
    %s17 = scalar_lea.vmem %s0, 13
    %v18 = vld [vmem:[%s17] sm:$0x1]
    %19 = vrot.lane.b32.xlu0 %v18, 104
    %v20 = vpop.permute.xlu0 %19
    %vm21 = vcmask 917312
    %22 = vst.msk [vmem:[#allocation0] sm:$0x1] %vm21, %v20
    %s23 = scalar_lea.vmem %s0, 12
    %v24 = vld [vmem:[%s23] sm:$0x1]
    %25 = vrot.lane.b32.xlu0 %v24, 96
    %v26 = vpop.permute.xlu0 %25
    %vm27 = vcmask 851712
    %28 = vst.msk [vmem:[#allocation0] sm:$0x1] %vm27, %v26
    %s29 = scalar_lea.vmem %s0, 11
    %v30 = vld [vmem:[%s29] sm:$0x1]
    %31 = vrot.lane.b32.xlu0 %v30, 88
    %v32 = vpop.permute.xlu0 %31
    %vm33 = vcmask 786112
    %34 = vst.msk [vmem:[#allocation0] sm:$0x1] %vm33, %v32
    %s35 = scalar_lea.vmem %s0, 10
    %v36 = vld [vmem:[%s35] sm:$0x1]
    %37 = vrot.lane.b32.xlu0 %v36, 80
    %v38 = vpop.permute.xlu0 %37
    %vm39 = vcmask 720512
    %40 = vst.msk [vmem:[#allocation0] sm:$0x1] %vm39, %v38
    %s41 = scalar_lea.vmem %s0, 9
    %v42 = vld [vmem:[%s41] sm:$0x1]
    %43 = vrot.lane.b32.xlu0 %v42, 72
    %v44 = vpop.permute.xlu0 %43
    %vm45 = vcmask 654912
    %46 = vst.msk [vmem:[#allocation0] sm:$0x1] %vm45, %v44
    %s47 = scalar_lea.vmem %s0, 8
    %v48 = vld [vmem:[%s47] sm:$0x1]
    %49 = vrot.lane.b32.xlu0 %v48, 64
    %v50 = vpop.permute.xlu0 %49
    %vm51 = vcmask 589312
    %52 = vst.msk [vmem:[#allocation0] sm:$0x1] %vm51, %v50
    %s53 = scalar_lea.vmem %s0, 7
    %v54 = vld [vmem:[%s53] sm:$0x1]
    %55 = vrot.lane.b32.xlu0 %v54, 56
    %v56 = vpop.permute.xlu0 %55
    %vm57 = vcmask 523712
    %58 = vst.msk [vmem:[#allocation0] sm:$0x1] %vm57, %v56
    %s59 = scalar_lea.vmem %s0, 6
    %v60 = vld [vmem:[%s59] sm:$0x1]
    %61 = vrot.lane.b32.xlu0 %v60, 48
    %v62 = vpop.permute.xlu0 %61
    %vm63 = vcmask 458112
    %64 = vst.msk [vmem:[#allocation0] sm:$0x1] %vm63, %v62
    %s65 = scalar_lea.vmem %s0, 5
    %v66 = vld [vmem:[%s65] sm:$0x1]
    %67 = vrot.lane.b32.xlu0 %v66, 40
    %v68 = vpop.permute.xlu0 %67
    %vm69 = vcmask 392512
    %70 = vst.msk [vmem:[#allocation0] sm:$0x1] %vm69, %v68
    %s71 = scalar_lea.vmem %s0, 4
    %v72 = vld [vmem:[%s71] sm:$0x1]
    %73 = vrot.lane.b32.xlu0 %v72, 32
    %v74 = vpop.permute.xlu0 %73
    %vm75 = vcmask 326912
    %76 = vst.msk [vmem:[#allocation0] sm:$0x1] %vm75, %v74
    %s77 = scalar_lea.vmem %s0, 3
    %v78 = vld [vmem:[%s77] sm:$0x1]
    %79 = vrot.lane.b32.xlu0 %v78, 24
    %v80 = vpop.permute.xlu0 %79
    %vm81 = vcmask 261312
    %82 = vst.msk [vmem:[#allocation0] sm:$0x1] %vm81, %v80
    %s83 = scalar_lea.vmem %s0, 2
    %v84 = vld [vmem:[%s83] sm:$0x1]
    %85 = vrot.lane.b32.xlu0 %v84, 16
    %v86 = vpop.permute.xlu0 %85
    %vm87 = vcmask 195712
    %88 = vst.msk [vmem:[#allocation0] sm:$0x1] %vm87, %v86
    %s89 = scalar_lea.vmem %s0, 1
    %v90 = vld [vmem:[%s89] sm:$0x1]
    %91 = vrot.lane.b32.xlu0 %v90, 8
    %v92 = vpop.permute.xlu0 %91
    %vm93 = vcmask 130112
    %94 = vst.msk [vmem:[#allocation0] sm:$0x1] %vm93, %v92
    %s96 = sshll.u32 1, 1
    %s97 = ssub.s32 %s96, 1
    %v99 = vld [vmem:[#allocation0] sm:%s97]
    %s100 = sshll.u32 1, 1
    %s101 = ssub.s32 %s100, 1
    %102 = vst [vmem:[%s1] sm:%s101] %v99

// kernel: residual_block.3
$region0: #{residual_block.3}
  #allocation0 [shape = 'u32[]', space=smem, size = 0x4, offset = 0x4, fixed_abs, tag = 'smem constant byte address 0x4 - core index']
  #allocation1 [shape = 'u32[144,128]{1,0:T(1,128)}', space=vmem, size = 0x12000, scoped, tag = 'internal scratch']
  %s0 = inlined_call_operand.vmem [shape: f32[32,128], index: 0, kind: input, shape index: {}]
  %s1 = inlined_call_operand.vmem [shape: bf16[3,128,128], index: 1, kind: input, shape index: {}]
  %s2 = inlined_call_operand.vmem [shape: f32[32,128], index: 2, kind: output, shape index: {0}]
  %s3 = inlined_call_operand.vmem [shape: f32[2,2,128], index: 3, kind: output, shape index: {1}]
  %4 = xla_tuple %s2, %s3
  %s5 = sld [smem:[#allocation0]]
  $region49: #{residual_block.3} parent=0
    _
  %s7 = ssub.s32 1, %s5
  %s8 = scalar_select 0, %s7, %s5
  loop: start=0, step=1, limit=4
  $region2: #{residual_block.3} parent=0 // loop_pre_header
    _
  $region3: #{residual_block.3} parent=0 // loop_header
    %s10 = sphi 0, %s14
    %p11 = scmp.ge.s32.totalorder %s10, 4
    %s20 = sphi 0, %s22
    %s23 = sphi 0, %s20
    %s24 = sphi 0, %s23
    %s40 = sphi 0, %s24
    %s44 = sphi 0, %s44
    %s46 = sphi 0, %s44
    %s47 = sphi 0, %s46
    %s61 = sphi 0, %s47
    %s67 = sphi 0, %s69
    %s70 = sphi 0, %s67
    %s71 = sphi 0, %s70
    %s87 = sphi 0, %s71
    %s93 = sphi 0, %s95
    %s96 = sphi 0, %s93
    %s97 = sphi 0, %s96
    %s113 = sphi 0, %s97
  $region4: #{residual_block.3} parent=0 // loop_header_branch
    %13 = sbr.rel (%p11) target = $region8
  $region5: #{residual_block.3} parent=0 // loop_body
    %s15 = ssub.s32 %s10, 1
    %s16 = ssub.s32 %s10, 2
    %s17 = sadd.s32 %s10, 1
    %s18 = ssub.s32 %s10, %s17
    %p19 = scmp.eq.s32.totalorder %s18, 0
    %s21 = sadd.s32 %s20, 1
    %s22 = scalar_select %p19, %s20, %s21
    %p25 = pneg %p19
    %p26 = scmp.eq.s32.totalorder %s10, 1
    %p27 = por %p25, %p26
    %p28 = scmp.ne.s32.totalorder %s20, %s23
    %p29 = scmp.eq.s32.totalorder %s10, 0
    %p30 = por %p28, %p29
    %p31 = scmp.ne.s32.totalorder %s20, %s23
    %p32 = scmp.eq.s32.totalorder %s15, 1
    %p33 = por %p31, %p32
    %p34 = scmp.ne.s32.totalorder %s23, %s24
    %p35 = scmp.eq.s32.totalorder %s15, 0
    %p36 = por %p34, %p35
    %p37 = scmp.ne.s32.totalorder %s23, %s24
    %p38 = scmp.eq.s32.totalorder %s16, 1
    %p39 = por %p37, %p38
    %p41 = scmp.ne.s32.totalorder %s24, %s40
    %p42 = scmp.eq.s32.totalorder %s16, 0
    %p43 = por %p41, %p42
    %s45 = sadd.s32 %s44, 1
    %p48 = scmp.eq.s32.totalorder %s10, 1
    %p49 = scmp.ne.s32.totalorder %s44, %s46
    %p50 = scmp.eq.s32.totalorder %s10, 0
    %p51 = por %p49, %p50
    %p52 = scmp.ne.s32.totalorder %s44, %s46
    %p53 = scmp.eq.s32.totalorder %s15, 1
    %p54 = por %p52, %p53
    %p55 = scmp.ne.s32.totalorder %s46, %s47
    %p56 = scmp.eq.s32.totalorder %s15, 0
    %p57 = por %p55, %p56
    %p58 = scmp.ne.s32.totalorder %s46, %s47
    %p59 = scmp.eq.s32.totalorder %s16, 1
    %p60 = por %p58, %p59
    %p62 = scmp.ne.s32.totalorder %s47, %s61
    %p63 = scmp.eq.s32.totalorder %s16, 0
    %p64 = por %p62, %p63
    %s65 = ssub.s32 %s10, %s17
    %p66 = scmp.eq.s32.totalorder %s65, 0
    %s68 = sadd.s32 %s67, 1
    %s69 = scalar_select %p66, %s67, %s68
    %p72 = pneg %p66
    %p73 = scmp.eq.s32.totalorder %s10, 1
    %p74 = por %p72, %p73
    %p75 = scmp.ne.s32.totalorder %s67, %s70
    %p76 = scmp.eq.s32.totalorder %s10, 0
    %p77 = por %p75, %p76
    %p78 = scmp.ne.s32.totalorder %s67, %s70
    %p79 = scmp.eq.s32.totalorder %s15, 1
    %p80 = por %p78, %p79
    %p81 = scmp.ne.s32.totalorder %s70, %s71
    %p82 = scmp.eq.s32.totalorder %s15, 0
    %p83 = por %p81, %p82
    %p84 = scmp.ne.s32.totalorder %s70, %s71
    %p85 = scmp.eq.s32.totalorder %s16, 1
    %p86 = por %p84, %p85
    %p88 = scmp.ne.s32.totalorder %s71, %s87
    %p89 = scmp.eq.s32.totalorder %s16, 0
    %p90 = por %p88, %p89
    %s91 = ssub.s32 %s10, %s17
    %p92 = scmp.eq.s32.totalorder %s91, 0
    %s94 = sadd.s32 %s93, 1
    %s95 = scalar_select %p92, %s93, %s94
    %p98 = pneg %p92
    %p99 = scmp.eq.s32.totalorder %s10, 1
    %p100 = por %p98, %p99
    %p101 = scmp.ne.s32.totalorder %s93, %s96
    %p102 = scmp.eq.s32.totalorder %s10, 0
    %p103 = por %p101, %p102
    %p104 = scmp.ne.s32.totalorder %s93, %s96
    %p105 = scmp.eq.s32.totalorder %s15, 1
    %p106 = por %p104, %p105
    %p107 = scmp.ne.s32.totalorder %s96, %s97
    %p108 = scmp.eq.s32.totalorder %s15, 0
    %p109 = por %p107, %p108
    %p110 = scmp.ne.s32.totalorder %s96, %s97
    %p111 = scmp.eq.s32.totalorder %s16, 1
    %p112 = por %p110, %p111
    %p114 = scmp.ne.s32.totalorder %s97, %s113
    %p115 = scmp.eq.s32.totalorder %s16, 0
    %p116 = por %p114, %p115
    %p117 = scmp.le.s32.totalorder 1, %s10
    %p118 = scmp.lt.s32.totalorder %s10, 3
    %p119 = pnand %p117, %p118
    %p120 = pneg %p119
    // Predicated region
    $region9: #{residual_block.3} parent=5 // pred_check
      _
    $region10: #{residual_block.3} parent=5 // pred_check_branch
      %122 = sbr.rel (%p119) target = $region12
    $region11: #{residual_block.3} parent=5 // pred_region
      %s123 = ssub.s32 %s10, 1
      // Predicated region
      $region13: #{residual_block.3} parent=11 // pred_check
        %p124 = pneg %p57
      $region14: #{residual_block.3} parent=11 // pred_check_branch
        %126 = sbr.rel (%p124) target = $region16
      $region15: #{residual_block.3} parent=11 // pred_region
        _
      $region16: #{residual_block.3} parent=11 // pred_fallthru
        _
    $region12: #{residual_block.3} parent=5 // pred_fallthru
      _
    %p127 = scmp.lt.s32.totalorder %s10, 2
    // Predicated region
    $region17: #{residual_block.3} parent=5 // pred_check
      %p128 = pneg %p127
    $region18: #{residual_block.3} parent=5 // pred_check_branch
      %130 = sbr.rel (%p128) target = $region20
    $region19: #{residual_block.3} parent=5 // pred_region
      // Predicated region
      $region21: #{residual_block.3} parent=19 // pred_check
        %p131 = pneg %p30
      $region22: #{residual_block.3} parent=19 // pred_check_branch
        %133 = sbr.rel (%p131) target = $region24
      $region23: #{residual_block.3} parent=19 // pred_region
        %s134 = smul.u32 2, %s10
        %p135 = scmp.lt.s32.totalorder %s134, 3
        %s136 = scalar_select %p135, %s134, 3
        %s137 = smul.addr %s136, 8
        %s138 = scalar_lea.vmem %s0, %s137
        %s139 = smul.u32 2, %s10
      $region24: #{residual_block.3} parent=19 // pred_fallthru
        _
    $region20: #{residual_block.3} parent=5 // pred_fallthru
      _
    %p140 = scmp.le.s32.totalorder 1, %s10
    %p141 = scmp.lt.s32.totalorder %s10, 3
    %p142 = pnand %p140, %p141
    %p143 = pneg %p142
    // Predicated region
    $region25: #{residual_block.3} parent=5 // pred_check
      _
    $region26: #{residual_block.3} parent=5 // pred_check_branch
      %145 = sbr.rel (%p142) target = $region28
    $region27: #{residual_block.3} parent=5 // pred_region
      %s146 = ssub.s32 %s10, 1
      %s147 = smul.u32 2, %s15
      %p148 = scmp.lt.s32.totalorder %s147, 3
      %s149 = scalar_select %p148, %s147, 3
      %s150 = smul.addr %s149, 8
      %s151 = scalar_lea.vmem %s0, %s150
      %p152 = pneg %p36
      %p153 = pneg %p33
      %p154 = pneg %p57
      %p155 = pneg %p54
      %p156 = pneg %p83
      %p157 = pneg %p80
      %s158 = smul.u32 2, %s15
      %p159 = scmp.lt.s32.totalorder %s158, 3
      %s160 = scalar_select %p159, %s158, 3
      %s161 = smul.addr %s160, 8
      %s162 = scalar_lea.vmem %s2, %s161
      %p163 = pneg %p109
      %p164 = pneg %p106
      %p165 = scmp.lt.s32.totalorder %s15, 1
      %s166 = scalar_select %p165, %s15, 1
      %s167 = smul.addr %s166, 2
      %s168 = scalar_lea.vmem %s3, %s167
      %s169 = smul.u32 2, %s15
      %p170 = scmp.lt.s32.totalorder %s169, 3
      %s171 = scalar_select %p170, %s169, 3
      %s172 = smul.addr %s171, 8
      %s173 = scalar_lea.vmem %s0, %s172
      %s174 = smul.u32 2, %s15
      %s175 = smul.u32 2, %s15
      %p176 = scmp.lt.s32.totalorder %s175, 3
      %s177 = scalar_select %p176, %s175, 3
      %s178 = smul.addr %s177, 8
      %s179 = scalar_lea.vmem %s2, %s178
      %s180 = smul.u32 2, %s15
      %p181 = scmp.lt.s32.totalorder %s15, 1
      %s182 = scalar_select %p181, %s15, 1
      %s183 = smul.addr %s182, 2
      %s184 = scalar_lea.vmem %s3, %s183
      %v186 = vld [vmem:[%s173] sm:$0xff]
      %v187 = vld [vmem:[%s173 + $0x8] sm:$0xff]
      %vm190 = vcmask 1040384
      %v191 = vrot.slane %v186, 7
      %v192 = vrot.slane %v187, 7
      %v193 = vsel %vm190, %v191, %v192
      %v196 = vsel %vm190, 0.0, %v191
      %vm197 = vcmask 1046528
      %v198 = vrot.slane %v186, 1
      %v199 = vrot.slane %v187, 1
      %v200 = vsel %vm197, %v198, %v199
      %v203 = vsel %vm197, %v199, 0.0
      %v204 = vpack.c.bf16 %v193, %v196
      %v205 = vld [vmem:[%s1] sm:$0xf]
      %v206 = vld [vmem:[%s1 + $0x4] sm:$0xf]
      %v207 = vld [vmem:[%s1 + $0x8] sm:$0xf]
      %v208 = vld [vmem:[%s1 + $0xc] sm:$0xf]
      %v209 = vld [vmem:[%s1 + $0x10] sm:$0xf]
      %v210 = vld [vmem:[%s1 + $0x14] sm:$0xf]
      %v211 = vld [vmem:[%s1 + $0x18] sm:$0xf]
      %v212 = vld [vmem:[%s1 + $0x1c] sm:$0xf]
      %v213 = vld [vmem:[%s1 + $0x20] sm:$0xf]
      %v214 = vld [vmem:[%s1 + $0x24] sm:$0xf]
      %v215 = vld [vmem:[%s1 + $0x28] sm:$0xf]
      %v216 = vld [vmem:[%s1 + $0x2c] sm:$0xf]
      %v217 = vld [vmem:[%s1 + $0x30] sm:$0xf]
      %v218 = vld [vmem:[%s1 + $0x34] sm:$0xf]
      %v219 = vld [vmem:[%s1 + $0x38] sm:$0xf]
      %v220 = vld [vmem:[%s1 + $0x3c] sm:$0xf]
      %v221 = vpack.c.bf16 %v187, %v186
      %s222 = scalar_lea.vmem %s1, 64
      %v223 = vld [vmem:[%s222] sm:$0xf]
      %v224 = vld [vmem:[%s222 + $0x4] sm:$0xf]
      %v225 = vld [vmem:[%s222 + $0x8] sm:$0xf]
      %v226 = vld [vmem:[%s222 + $0xc] sm:$0xf]
      %v227 = vld [vmem:[%s222 + $0x10] sm:$0xf]
      %v228 = vld [vmem:[%s222 + $0x14] sm:$0xf]
      %v229 = vld [vmem:[%s222 + $0x18] sm:$0xf]
      %v230 = vld [vmem:[%s222 + $0x1c] sm:$0xf]
      %v231 = vld [vmem:[%s222 + $0x20] sm:$0xf]
      %v232 = vld [vmem:[%s222 + $0x24] sm:$0xf]
      %v233 = vld [vmem:[%s222 + $0x28] sm:$0xf]
      %v234 = vld [vmem:[%s222 + $0x2c] sm:$0xf]
      %v235 = vld [vmem:[%s222 + $0x30] sm:$0xf]
      %v236 = vld [vmem:[%s222 + $0x34] sm:$0xf]
      %v237 = vld [vmem:[%s222 + $0x38] sm:$0xf]
      %v238 = vld [vmem:[%s222 + $0x3c] sm:$0xf]
      %v255 = vunpack.c.l.b16 %v223
      %v256 = vunpack.c.l.b16 %v224
      %v257 = vunpack.c.l.b16 %v225
      %v258 = vunpack.c.l.b16 %v226
      %v259 = vunpack.c.l.b16 %v227
      %v260 = vunpack.c.l.b16 %v228
      %v261 = vunpack.c.l.b16 %v229
      %v262 = vunpack.c.l.b16 %v230
      %v263 = vunpack.c.l.b16 %v231
      %v264 = vunpack.c.l.b16 %v232
      %v265 = vunpack.c.l.b16 %v233
      %v266 = vunpack.c.l.b16 %v234
      %v267 = vunpack.c.l.b16 %v235
      %v268 = vunpack.c.l.b16 %v236
      %v269 = vunpack.c.l.b16 %v237
      %v270 = vunpack.c.l.b16 %v238
      %v271 = vpack.c.b16 %v256, %v255
      %v272 = vpack.c.b16 %v258, %v257
      %v273 = vpack.c.b16 %v260, %v259
      %v274 = vpack.c.b16 %v262, %v261
      %v275 = vpack.c.b16 %v264, %v263
      %v276 = vpack.c.b16 %v266, %v265
      %v277 = vpack.c.b16 %v268, %v267
      %v278 = vpack.c.b16 %v270, %v269
      %287 = vmatprep.subr.bf16.mxu0 0
      %288 = vmatpush1.bf16.msra.mxu0 %v278
      %289 = vmatprep.subr.bf16.mxu0 0
      %290 = vmatpush1.bf16.msra.mxu0 %v277
      %291 = vmatprep.subr.bf16.mxu0 0
      %292 = vmatpush1.bf16.msra.mxu0 %v276
      %293 = vmatprep.subr.bf16.mxu0 0
      %294 = vmatpush1.bf16.msra.mxu0 %v275
      %295 = vmatprep.subr.bf16.mxu0 0
      %296 = vmatpush1.bf16.msra.mxu0 %v274
      %297 = vmatprep.subr.bf16.mxu0 0
      %298 = vmatpush1.bf16.msra.mxu0 %v273
      %299 = vmatprep.subr.bf16.mxu0 0
      %300 = vmatpush1.bf16.msra.mxu0 %v272
      %301 = vmatprep.subr.bf16.mxu0 0
      %302 = vmatpush1.bf16.msra.mxu0 %v271
      %303 = vmatprep.subr.bf16.mxu0 0
      %304 = vmatpush2.bf16.msra.mxu0 0
      %305 = vmatprep.subr.bf16.mxu0 0
      %306 = vmatpush2.bf16.msra.mxu0 0
      %307 = vmatprep.subr.bf16.mxu0 0
      %308 = vmatpush2.bf16.msra.mxu0 0
      %309 = vmatprep.subr.bf16.mxu0 0
      %310 = vmatpush2.bf16.msra.mxu0 0
      %311 = vmatprep.subr.bf16.mxu0 0
      %312 = vmatpush2.bf16.msra.mxu0 0
      %313 = vmatprep.subr.bf16.mxu0 0
      %314 = vmatpush2.bf16.msra.mxu0 0
      %315 = vmatprep.subr.bf16.mxu0 0
      %316 = vmatpush2.bf16.msra.mxu0 0
      %317 = vmatprep.subr.bf16.mxu0 0
      %318 = vmatpush2.bf16.msra.mxu0 0
      %319 = vmatprep.mubr.bf16.mxu0 0
      %320 = vmatmul.mubr.bf16.gmra.mxu0 %v221
      %v321 = vpop.f32.mrf.mxu0
      %v322 = vadd.f32 0.0, %v321
      %v323 = vpop.f32.mrf.mxu0
      %v324 = vpop.f32.mrf.mxu0
      %v325 = vadd.f32 0.0, %v324
      %v326 = vpop.f32.mrf.mxu0
      %327 = vdwg.mxu0
      %v344 = vunpack.c.l.b16 %v205
      %v345 = vunpack.c.l.b16 %v206
      %v346 = vunpack.c.l.b16 %v207
      %v347 = vunpack.c.l.b16 %v208
      %v348 = vunpack.c.l.b16 %v209
      %v349 = vunpack.c.l.b16 %v210
      %v350 = vunpack.c.l.b16 %v211
      %v351 = vunpack.c.l.b16 %v212
      %v352 = vunpack.c.l.b16 %v213
      %v353 = vunpack.c.l.b16 %v214
      %v354 = vunpack.c.l.b16 %v215
      %v355 = vunpack.c.l.b16 %v216
      %v356 = vunpack.c.l.b16 %v217
      %v357 = vunpack.c.l.b16 %v218
      %v358 = vunpack.c.l.b16 %v219
      %v359 = vunpack.c.l.b16 %v220
      %v360 = vpack.c.b16 %v345, %v344
      %v361 = vpack.c.b16 %v347, %v346
      %v362 = vpack.c.b16 %v349, %v348
      %v363 = vpack.c.b16 %v351, %v350
      %v364 = vpack.c.b16 %v353, %v352
      %v365 = vpack.c.b16 %v355, %v354
      %v366 = vpack.c.b16 %v357, %v356
      %v367 = vpack.c.b16 %v359, %v358
      %376 = vmatprep.subr.bf16.mxu0 0
      %377 = vmatpush1.bf16.msra.mxu0 %v367
      %378 = vmatprep.subr.bf16.mxu0 0
      %379 = vmatpush1.bf16.msra.mxu0 %v366
      %380 = vmatprep.subr.bf16.mxu0 0
      %381 = vmatpush1.bf16.msra.mxu0 %v365
      %382 = vmatprep.subr.bf16.mxu0 0
      %383 = vmatpush1.bf16.msra.mxu0 %v364
      %384 = vmatprep.subr.bf16.mxu0 0
      %385 = vmatpush1.bf16.msra.mxu0 %v363
      %386 = vmatprep.subr.bf16.mxu0 0
      %387 = vmatpush1.bf16.msra.mxu0 %v362
      %388 = vmatprep.subr.bf16.mxu0 0
      %389 = vmatpush1.bf16.msra.mxu0 %v361
      %390 = vmatprep.subr.bf16.mxu0 0
      %391 = vmatpush1.bf16.msra.mxu0 %v360
      %392 = vmatprep.subr.bf16.mxu0 0
      %393 = vmatpush2.bf16.msra.mxu0 0
      %394 = vmatprep.subr.bf16.mxu0 0
      %395 = vmatpush2.bf16.msra.mxu0 0
      %396 = vmatprep.subr.bf16.mxu0 0
      %397 = vmatpush2.bf16.msra.mxu0 0
      %398 = vmatprep.subr.bf16.mxu0 0
      %399 = vmatpush2.bf16.msra.mxu0 0
      %400 = vmatprep.subr.bf16.mxu0 0
      %401 = vmatpush2.bf16.msra.mxu0 0
      %402 = vmatprep.subr.bf16.mxu0 0
      %403 = vmatpush2.bf16.msra.mxu0 0
      %404 = vmatprep.subr.bf16.mxu0 0
      %405 = vmatpush2.bf16.msra.mxu0 0
      %406 = vmatprep.subr.bf16.mxu0 0
      %407 = vmatpush2.bf16.msra.mxu0 0
      %408 = vmatprep.mubr.bf16.mxu0 0
      %409 = vmatmul.mubr.bf16.gmra.mxu0 %v204
      %v410 = vpop.f32.mrf.mxu0
      %v411 = vadd.f32 %v322, %v410
      %v412 = vpop.f32.mrf.mxu0
      %v413 = vpop.f32.mrf.mxu0
      %v414 = vadd.f32 %v325, %v413
      %v415 = vpop.f32.mrf.mxu0
      %416 = vdwg.mxu0
      %v417 = vpack.c.bf16 %v203, %v200
      %s418 = scalar_lea.vmem %s1, 128
      %v419 = vld [vmem:[%s418] sm:$0xf]
      %v420 = vld [vmem:[%s418 + $0x4] sm:$0xf]
      %v421 = vld [vmem:[%s418 + $0x8] sm:$0xf]
      %v422 = vld [vmem:[%s418 + $0xc] sm:$0xf]
      %v423 = vld [vmem:[%s418 + $0x10] sm:$0xf]
      %v424 = vld [vmem:[%s418 + $0x14] sm:$0xf]
      %v425 = vld [vmem:[%s418 + $0x18] sm:$0xf]
      %v426 = vld [vmem:[%s418 + $0x1c] sm:$0xf]
      %v427 = vld [vmem:[%s418 + $0x20] sm:$0xf]
      %v428 = vld [vmem:[%s418 + $0x24] sm:$0xf]
      %v429 = vld [vmem:[%s418 + $0x28] sm:$0xf]
      %v430 = vld [vmem:[%s418 + $0x2c] sm:$0xf]
      %v431 = vld [vmem:[%s418 + $0x30] sm:$0xf]
      %v432 = vld [vmem:[%s418 + $0x34] sm:$0xf]
      %v433 = vld [vmem:[%s418 + $0x38] sm:$0xf]
      %v434 = vld [vmem:[%s418 + $0x3c] sm:$0xf]
      %v451 = vunpack.c.l.b16 %v419
      %v452 = vunpack.c.l.b16 %v420
      %v453 = vunpack.c.l.b16 %v421
      %v454 = vunpack.c.l.b16 %v422
      %v455 = vunpack.c.l.b16 %v423
      %v456 = vunpack.c.l.b16 %v424
      %v457 = vunpack.c.l.b16 %v425
      %v458 = vunpack.c.l.b16 %v426
      %v459 = vunpack.c.l.b16 %v427
      %v460 = vunpack.c.l.b16 %v428
      %v461 = vunpack.c.l.b16 %v429
      %v462 = vunpack.c.l.b16 %v430
      %v463 = vunpack.c.l.b16 %v431
      %v464 = vunpack.c.l.b16 %v432
      %v465 = vunpack.c.l.b16 %v433
      %v466 = vunpack.c.l.b16 %v434
      %v467 = vpack.c.b16 %v452, %v451
      %v468 = vpack.c.b16 %v454, %v453
      %v469 = vpack.c.b16 %v456, %v455
      %v470 = vpack.c.b16 %v458, %v457
      %v471 = vpack.c.b16 %v460, %v459
      %v472 = vpack.c.b16 %v462, %v461
      %v473 = vpack.c.b16 %v464, %v463
      %v474 = vpack.c.b16 %v466, %v465
      %483 = vmatprep.subr.bf16.mxu0 0
      %484 = vmatpush1.bf16.msra.mxu0 %v474
      %485 = vmatprep.subr.bf16.mxu0 0
      %486 = vmatpush1.bf16.msra.mxu0 %v473
      %487 = vmatprep.subr.bf16.mxu0 0
      %488 = vmatpush1.bf16.msra.mxu0 %v472
      %489 = vmatprep.subr.bf16.mxu0 0
      %490 = vmatpush1.bf16.msra.mxu0 %v471
      %491 = vmatprep.subr.bf16.mxu0 0
      %492 = vmatpush1.bf16.msra.mxu0 %v470
      %493 = vmatprep.subr.bf16.mxu0 0
      %494 = vmatpush1.bf16.msra.mxu0 %v469
      %495 = vmatprep.subr.bf16.mxu0 0
      %496 = vmatpush1.bf16.msra.mxu0 %v468
      %497 = vmatprep.subr.bf16.mxu0 0
      %498 = vmatpush1.bf16.msra.mxu0 %v467
      %499 = vmatprep.subr.bf16.mxu0 0
      %500 = vmatpush2.bf16.msra.mxu0 0
      %501 = vmatprep.subr.bf16.mxu0 0
      %502 = vmatpush2.bf16.msra.mxu0 0
      %503 = vmatprep.subr.bf16.mxu0 0
      %504 = vmatpush2.bf16.msra.mxu0 0
      %505 = vmatprep.subr.bf16.mxu0 0
      %506 = vmatpush2.bf16.msra.mxu0 0
      %507 = vmatprep.subr.bf16.mxu0 0
      %508 = vmatpush2.bf16.msra.mxu0 0
      %509 = vmatprep.subr.bf16.mxu0 0
      %510 = vmatpush2.bf16.msra.mxu0 0
      %511 = vmatprep.subr.bf16.mxu0 0
      %512 = vmatpush2.bf16.msra.mxu0 0
      %513 = vmatprep.subr.bf16.mxu0 0
      %514 = vmatpush2.bf16.msra.mxu0 0
      %515 = vmatprep.mubr.bf16.mxu0 0
      %516 = vmatmul.mubr.bf16.gmra.mxu0 %v417
      %v517 = vpop.f32.mrf.mxu0
      %v518 = vadd.f32 0.0, %v517
      %v519 = vpop.f32.mrf.mxu0
      %v520 = vpop.f32.mrf.mxu0
      %v521 = vadd.f32 0.0, %v520
      %v522 = vpop.f32.mrf.mxu0
      %523 = vdwg.mxu0
      %v524 = vadd.f32 %v411, %v518
      %v525 = vadd.f32 %v414, %v521
      %526 = vst [vmem:[%s179] sm:$0xff] %v524
      %527 = vst [vmem:[%s179 + $0x8] sm:$0xff] %v525
      %v528 = vadd.f32 %v524, %v525
      %v529 = vrot.slane %v528, 4
      %v530 = vadd.f32 %v528, %v529
      %v531 = vrot.slane %v530, 2
      %v532 = vadd.f32 %v530, %v531
      %v533 = vrot.slane %v532, 1
      %v534 = vadd.f32 %v532, %v533
      %v535 = vmul.f32 %v524, %v524
      %v536 = vmul.f32 %v525, %v525
      %v537 = vadd.f32 %v535, %v536
      %v538 = vrot.slane %v537, 4
      %v539 = vadd.f32 %v537, %v538
      %v540 = vrot.slane %v539, 2
      %v541 = vadd.f32 %v539, %v540
      %v542 = vrot.slane %v541, 1
      %v543 = vadd.f32 %v541, %v542
      %v544 = vsel %vm190, %v534, %v543
      %545 = vst [vmem:[%s184] sm:$0x3] %v544
      %s546 = smul.u32 2, %s15
      %p547 = scmp.lt.s32.totalorder %s546, 3
      %s548 = scalar_select %p547, %s546, 3
      %s549 = smul.addr %s548, 8
      %s550 = scalar_lea.vmem %s2, %s549
      %p551 = scmp.lt.s32.totalorder %s15, 1
      %s552 = scalar_select %p551, %s15, 1
      %s553 = smul.addr %s552, 2
      %s554 = scalar_lea.vmem %s3, %s553
      // Predicated region
      $region29: #{residual_block.3} parent=27 // pred_check
        %p555 = pneg %p80
      $region30: #{residual_block.3} parent=27 // pred_check_branch
        %557 = sbr.rel (%p555) target = $region32
      $region31: #{residual_block.3} parent=27 // pred_region
        %s558 = smul.u32 2, %s15
      $region32: #{residual_block.3} parent=27 // pred_fallthru
        _
      // Predicated region
      $region33: #{residual_block.3} parent=27 // pred_check
        %p559 = pneg %p106
      $region34: #{residual_block.3} parent=27 // pred_check_branch
        %561 = sbr.rel (%p559) target = $region36
      $region35: #{residual_block.3} parent=27 // pred_region
        _
      $region36: #{residual_block.3} parent=27 // pred_fallthru
        _
    $region28: #{residual_block.3} parent=5 // pred_fallthru
      _
    %p562 = scmp.le.s32.totalorder 2, %s10
    // Predicated region
    $region37: #{residual_block.3} parent=5 // pred_check
      %p563 = pneg %p562
    $region38: #{residual_block.3} parent=5 // pred_check_branch
      %565 = sbr.rel (%p563) target = $region40
    $region39: #{residual_block.3} parent=5 // pred_region
      %s566 = ssub.s32 %s10, 2
      // Predicated region
      $region41: #{residual_block.3} parent=39 // pred_check
        %p567 = pneg %p86
      $region42: #{residual_block.3} parent=39 // pred_check_branch
        %569 = sbr.rel (%p567) target = $region44
      $region43: #{residual_block.3} parent=39 // pred_region
        %s570 = smul.u32 2, %s16
        %p571 = scmp.lt.s32.totalorder %s570, 3
        %s572 = scalar_select %p571, %s570, 3
        %s573 = smul.addr %s572, 8
        %s574 = scalar_lea.vmem %s2, %s573
      $region44: #{residual_block.3} parent=39 // pred_fallthru
        _
      // Predicated region
      $region45: #{residual_block.3} parent=39 // pred_check
        %p575 = pneg %p112
      $region46: #{residual_block.3} parent=39 // pred_check_branch
        %577 = sbr.rel (%p575) target = $region48
      $region47: #{residual_block.3} parent=39 // pred_region
        %p578 = scmp.lt.s32.totalorder %s16, 1
        %s579 = scalar_select %p578, %s16, 1
        %s580 = smul.addr %s579, 2
        %s581 = scalar_lea.vmem %s3, %s580
      $region48: #{residual_block.3} parent=39 // pred_fallthru
        _
    $region40: #{residual_block.3} parent=5 // pred_fallthru
      _
  $region6: #{residual_block.3} parent=0 // loop_footer
    %s14 = sadd.s32 1, %s10
  $region7: #{residual_block.3} parent=0 // loop_footer_branch
    %9 = sbr.rel target = $region3
  $region8: #{residual_block.3} parent=0 // loop_exit
    _

// kernel: residual_block.5
$region0: #{residual_block.5}
  #allocation0 [shape = 'u32[]', space=smem, size = 0x4, offset = 0x4, fixed_abs, tag = 'smem constant byte address 0x4 - core index']
  #allocation1 [shape = 'u32[144,128]{1,0:T(1,128)}', space=vmem, size = 0x12000, scoped, tag = 'internal scratch']
  %s0 = inlined_call_operand.vmem [shape: f32[32,128], index: 0, kind: input, shape index: {}]
  %s1 = inlined_call_operand.vmem [shape: f32[32,128], index: 1, kind: input, shape index: {}]
  %s2 = inlined_call_operand.vmem [shape: f32[1,128], index: 2, kind: input, shape index: {}]
  %s3 = inlined_call_operand.vmem [shape: f32[1,128], index: 3, kind: input, shape index: {}]
  %s4 = inlined_call_operand.vmem [shape: f32[32,128], index: 4, kind: output, shape index: {}]
  %s5 = sld [smem:[#allocation0]]
  $region49: #{residual_block.5} parent=0
    _
  %s7 = ssub.s32 1, %s5
  %s8 = scalar_select 0, %s7, %s5
  loop: start=0, step=1, limit=4
  $region2: #{residual_block.5} parent=0 // loop_pre_header
    _
  $region3: #{residual_block.5} parent=0 // loop_header
    %s10 = sphi 0, %s14
    %p11 = scmp.ge.s32.totalorder %s10, 4
    %s20 = sphi 0, %s22
    %s23 = sphi 0, %s20
    %s24 = sphi 0, %s23
    %s40 = sphi 0, %s24
    %s46 = sphi 0, %s48
    %s49 = sphi 0, %s46
    %s50 = sphi 0, %s49
    %s66 = sphi 0, %s50
    %s70 = sphi 0, %s70
    %s72 = sphi 0, %s70
    %s73 = sphi 0, %s72
    %s87 = sphi 0, %s73
    %s91 = sphi 0, %s91
    %s93 = sphi 0, %s91
    %s94 = sphi 0, %s93
    %s108 = sphi 0, %s94
    %s114 = sphi 0, %s116
    %s117 = sphi 0, %s114
    %s118 = sphi 0, %s117
    %s134 = sphi 0, %s118
  $region4: #{residual_block.5} parent=0 // loop_header_branch
    %13 = sbr.rel (%p11) target = $region8
  $region5: #{residual_block.5} parent=0 // loop_body
    %s15 = ssub.s32 %s10, 1
    %s16 = ssub.s32 %s10, 2
    %s17 = sadd.s32 %s10, 1
    %s18 = ssub.s32 %s10, %s17
    %p19 = scmp.eq.s32.totalorder %s18, 0
    %s21 = sadd.s32 %s20, 1
    %s22 = scalar_select %p19, %s20, %s21
    %p25 = pneg %p19
    %p26 = scmp.eq.s32.totalorder %s10, 1
    %p27 = por %p25, %p26
    %p28 = scmp.ne.s32.totalorder %s20, %s23
    %p29 = scmp.eq.s32.totalorder %s10, 0
    %p30 = por %p28, %p29
    %p31 = scmp.ne.s32.totalorder %s20, %s23
    %p32 = scmp.eq.s32.totalorder %s15, 1
    %p33 = por %p31, %p32
    %p34 = scmp.ne.s32.totalorder %s23, %s24
    %p35 = scmp.eq.s32.totalorder %s15, 0
    %p36 = por %p34, %p35
    %p37 = scmp.ne.s32.totalorder %s23, %s24
    %p38 = scmp.eq.s32.totalorder %s16, 1
    %p39 = por %p37, %p38
    %p41 = scmp.ne.s32.totalorder %s24, %s40
    %p42 = scmp.eq.s32.totalorder %s16, 0
    %p43 = por %p41, %p42
    %s44 = ssub.s32 %s10, %s17
    %p45 = scmp.eq.s32.totalorder %s44, 0
    %s47 = sadd.s32 %s46, 1
    %s48 = scalar_select %p45, %s46, %s47
    %p51 = pneg %p45
    %p52 = scmp.eq.s32.totalorder %s10, 1
    %p53 = por %p51, %p52
    %p54 = scmp.ne.s32.totalorder %s46, %s49
    %p55 = scmp.eq.s32.totalorder %s10, 0
    %p56 = por %p54, %p55
    %p57 = scmp.ne.s32.totalorder %s46, %s49
    %p58 = scmp.eq.s32.totalorder %s15, 1
    %p59 = por %p57, %p58
    %p60 = scmp.ne.s32.totalorder %s49, %s50
    %p61 = scmp.eq.s32.totalorder %s15, 0
    %p62 = por %p60, %p61
    %p63 = scmp.ne.s32.totalorder %s49, %s50
    %p64 = scmp.eq.s32.totalorder %s16, 1
    %p65 = por %p63, %p64
    %p67 = scmp.ne.s32.totalorder %s50, %s66
    %p68 = scmp.eq.s32.totalorder %s16, 0
    %p69 = por %p67, %p68
    %s71 = sadd.s32 %s70, 1
    %p74 = scmp.eq.s32.totalorder %s10, 1
    %p75 = scmp.ne.s32.totalorder %s70, %s72
    %p76 = scmp.eq.s32.totalorder %s10, 0
    %p77 = por %p75, %p76
    %p78 = scmp.ne.s32.totalorder %s70, %s72
    %p79 = scmp.eq.s32.totalorder %s15, 1
    %p80 = por %p78, %p79
    %p81 = scmp.ne.s32.totalorder %s72, %s73
    %p82 = scmp.eq.s32.totalorder %s15, 0
    %p83 = por %p81, %p82
    %p84 = scmp.ne.s32.totalorder %s72, %s73
    %p85 = scmp.eq.s32.totalorder %s16, 1
    %p86 = por %p84, %p85
    %p88 = scmp.ne.s32.totalorder %s73, %s87
    %p89 = scmp.eq.s32.totalorder %s16, 0
    %p90 = por %p88, %p89
    %s92 = sadd.s32 %s91, 1
    %p95 = scmp.eq.s32.totalorder %s10, 1
    %p96 = scmp.ne.s32.totalorder %s91, %s93
    %p97 = scmp.eq.s32.totalorder %s10, 0
    %p98 = por %p96, %p97
    %p99 = scmp.ne.s32.totalorder %s91, %s93
    %p100 = scmp.eq.s32.totalorder %s15, 1
    %p101 = por %p99, %p100
    %p102 = scmp.ne.s32.totalorder %s93, %s94
    %p103 = scmp.eq.s32.totalorder %s15, 0
    %p104 = por %p102, %p103
    %p105 = scmp.ne.s32.totalorder %s93, %s94
    %p106 = scmp.eq.s32.totalorder %s16, 1
    %p107 = por %p105, %p106
    %p109 = scmp.ne.s32.totalorder %s94, %s108
    %p110 = scmp.eq.s32.totalorder %s16, 0
    %p111 = por %p109, %p110
    %s112 = ssub.s32 %s10, %s17
    %p113 = scmp.eq.s32.totalorder %s112, 0
    %s115 = sadd.s32 %s114, 1
    %s116 = scalar_select %p113, %s114, %s115
    %p119 = pneg %p113
    %p120 = scmp.eq.s32.totalorder %s10, 1
    %p121 = por %p119, %p120
    %p122 = scmp.ne.s32.totalorder %s114, %s117
    %p123 = scmp.eq.s32.totalorder %s10, 0
    %p124 = por %p122, %p123
    %p125 = scmp.ne.s32.totalorder %s114, %s117
    %p126 = scmp.eq.s32.totalorder %s15, 1
    %p127 = por %p125, %p126
    %p128 = scmp.ne.s32.totalorder %s117, %s118
    %p129 = scmp.eq.s32.totalorder %s15, 0
    %p130 = por %p128, %p129
    %p131 = scmp.ne.s32.totalorder %s117, %s118
    %p132 = scmp.eq.s32.totalorder %s16, 1
    %p133 = por %p131, %p132
    %p135 = scmp.ne.s32.totalorder %s118, %s134
    %p136 = scmp.eq.s32.totalorder %s16, 0
    %p137 = por %p135, %p136
    %p138 = scmp.le.s32.totalorder 1, %s10
    %p139 = scmp.lt.s32.totalorder %s10, 3
    %p140 = pnand %p138, %p139
    %p141 = pneg %p140
    // Predicated region
    $region9: #{residual_block.5} parent=5 // pred_check
      _
    $region10: #{residual_block.5} parent=5 // pred_check_branch
      %143 = sbr.rel (%p140) target = $region12
    $region11: #{residual_block.5} parent=5 // pred_region
      %s144 = ssub.s32 %s10, 1
      // Predicated region
      $region13: #{residual_block.5} parent=11 // pred_check
        %p145 = pneg %p83
      $region14: #{residual_block.5} parent=11 // pred_check_branch
        %147 = sbr.rel (%p145) target = $region16
      $region15: #{residual_block.5} parent=11 // pred_region
        _
      $region16: #{residual_block.5} parent=11 // pred_fallthru
        _
      // Predicated region
      $region17: #{residual_block.5} parent=11 // pred_check
        %p148 = pneg %p104
      $region18: #{residual_block.5} parent=11 // pred_check_branch
        %150 = sbr.rel (%p148) target = $region20
      $region19: #{residual_block.5} parent=11 // pred_region
        _
      $region20: #{residual_block.5} parent=11 // pred_fallthru
        _
    $region12: #{residual_block.5} parent=5 // pred_fallthru
      _
    %p151 = scmp.lt.s32.totalorder %s10, 2
    // Predicated region
    $region21: #{residual_block.5} parent=5 // pred_check
      %p152 = pneg %p151
    $region22: #{residual_block.5} parent=5 // pred_check_branch
      %154 = sbr.rel (%p152) target = $region24
    $region23: #{residual_block.5} parent=5 // pred_region
      // Predicated region
      $region25: #{residual_block.5} parent=23 // pred_check
        %p155 = pneg %p30
      $region26: #{residual_block.5} parent=23 // pred_check_branch
        %157 = sbr.rel (%p155) target = $region28
      $region27: #{residual_block.5} parent=23 // pred_region
        %s158 = smul.u32 2, %s10
        %p159 = scmp.lt.s32.totalorder %s158, 3
        %s160 = scalar_select %p159, %s158, 3
        %s161 = smul.addr %s160, 8
        %s162 = scalar_lea.vmem %s0, %s161
        %s163 = smul.u32 2, %s10
      $region28: #{residual_block.5} parent=23 // pred_fallthru
        _
      // Predicated region
      $region29: #{residual_block.5} parent=23 // pred_check
        %p164 = pneg %p56
      $region30: #{residual_block.5} parent=23 // pred_check_branch
        %166 = sbr.rel (%p164) target = $region32
      $region31: #{residual_block.5} parent=23 // pred_region
        %s167 = smul.u32 2, %s10
        %p168 = scmp.lt.s32.totalorder %s167, 3
        %s169 = scalar_select %p168, %s167, 3
        %s170 = smul.addr %s169, 8
        %s171 = scalar_lea.vmem %s1, %s170
        %s172 = smul.u32 2, %s10
      $region32: #{residual_block.5} parent=23 // pred_fallthru
        _
    $region24: #{residual_block.5} parent=5 // pred_fallthru
      _
    %p173 = scmp.le.s32.totalorder 1, %s10
    %p174 = scmp.lt.s32.totalorder %s10, 3
    %p175 = pnand %p173, %p174
    %p176 = pneg %p175
    // Predicated region
    $region33: #{residual_block.5} parent=5 // pred_check
      _
    $region34: #{residual_block.5} parent=5 // pred_check_branch
      %178 = sbr.rel (%p175) target = $region36
    $region35: #{residual_block.5} parent=5 // pred_region
      %s179 = ssub.s32 %s10, 1
      %s180 = smul.u32 2, %s15
      %p181 = scmp.lt.s32.totalorder %s180, 3
      %s182 = scalar_select %p181, %s180, 3
      %s183 = smul.addr %s182, 8
      %s184 = scalar_lea.vmem %s0, %s183
      %p185 = pneg %p36
      %p186 = pneg %p33
      %s187 = smul.u32 2, %s15
      %p188 = scmp.lt.s32.totalorder %s187, 3
      %s189 = scalar_select %p188, %s187, 3
      %s190 = smul.addr %s189, 8
      %s191 = scalar_lea.vmem %s1, %s190
      %p192 = pneg %p62
      %p193 = pneg %p59
      %p194 = pneg %p83
      %p195 = pneg %p80
      %p196 = pneg %p104
      %p197 = pneg %p101
      %p198 = pneg %p130
      %p199 = pneg %p127
      %s200 = smul.u32 2, %s15
      %p201 = scmp.lt.s32.totalorder %s200, 3
      %s202 = scalar_select %p201, %s200, 3
      %s203 = smul.addr %s202, 8
      %s204 = scalar_lea.vmem %s4, %s203
      %s205 = smul.u32 2, %s15
      %p206 = scmp.lt.s32.totalorder %s205, 3
      %s207 = scalar_select %p206, %s205, 3
      %s208 = smul.addr %s207, 8
      %s209 = scalar_lea.vmem %s0, %s208
      %s210 = smul.u32 2, %s15
      %s211 = smul.u32 2, %s15
      %p212 = scmp.lt.s32.totalorder %s211, 3
      %s213 = scalar_select %p212, %s211, 3
      %s214 = smul.addr %s213, 8
      %s215 = scalar_lea.vmem %s1, %s214
      %s216 = smul.u32 2, %s15
      %s217 = smul.u32 2, %s15
      %p218 = scmp.lt.s32.totalorder %s217, 3
      %s219 = scalar_select %p218, %s217, 3
      %s220 = smul.addr %s219, 8
      %s221 = scalar_lea.vmem %s4, %s220
      %s222 = smul.u32 2, %s15
      %v223 = vld [vmem:[%s209] sm:$0xff]
      %v224 = vld [vmem:[%s209 + $0x8] sm:$0xff]
      %v225 = vld [vmem:[%s215] sm:$0xff]
      %v226 = vld [vmem:[%s215 + $0x8] sm:$0xff]
      %v227 = vld [vmem:[%s2] sm:$0x1]
      %v229 = vlaneseq
      %v230 = vshrl.u32 %v229, 7
      %v231 = vsub.s32 0, %v230
      %v232 = vrot.slane %v227, %v231
      %v234 = vmul.f32 %v225, %v232
      %v235 = vmul.f32 %v226, %v232
      %v236 = vadd.f32 %v223, %v234
      %v237 = vadd.f32 %v224, %v235
      %v238 = vld [vmem:[%s3] sm:$0x1]
      %v240 = vlaneseq
      %v241 = vshrl.u32 %v240, 7
      %v242 = vsub.s32 0, %v241
      %v243 = vrot.slane %v238, %v242
      %v245 = vadd.f32 %v236, %v243
      %v246 = vadd.f32 %v237, %v243
      %v247 = vmax.f32 %v245, 0.0
      %v248 = vmax.f32 %v246, 0.0
      %249 = vst [vmem:[%s221] sm:$0xff] %v247
      %250 = vst [vmem:[%s221 + $0x8] sm:$0xff] %v248
      %s251 = smul.u32 2, %s15
      %p252 = scmp.lt.s32.totalorder %s251, 3
      %s253 = scalar_select %p252, %s251, 3
      %s254 = smul.addr %s253, 8
      %s255 = scalar_lea.vmem %s4, %s254
      // Predicated region
      $region37: #{residual_block.5} parent=35 // pred_check
        %p256 = pneg %p127
      $region38: #{residual_block.5} parent=35 // pred_check_branch
        %258 = sbr.rel (%p256) target = $region40
      $region39: #{residual_block.5} parent=35 // pred_region
        %s259 = smul.u32 2, %s15
      $region40: #{residual_block.5} parent=35 // pred_fallthru
        _
    $region36: #{residual_block.5} parent=5 // pred_fallthru
      _
    %p260 = scmp.le.s32.totalorder 2, %s10
    // Predicated region
    $region41: #{residual_block.5} parent=5 // pred_check
      %p261 = pneg %p260
    $region42: #{residual_block.5} parent=5 // pred_check_branch
      %263 = sbr.rel (%p261) target = $region44
    $region43: #{residual_block.5} parent=5 // pred_region
      %s264 = ssub.s32 %s10, 2
      // Predicated region
      $region45: #{residual_block.5} parent=43 // pred_check
        %p265 = pneg %p133
      $region46: #{residual_block.5} parent=43 // pred_check_branch
        %267 = sbr.rel (%p265) target = $region48
      $region47: #{residual_block.5} parent=43 // pred_region
        %s268 = smul.u32 2, %s16
        %p269 = scmp.lt.s32.totalorder %s268, 3
        %s270 = scalar_select %p269, %s268, 3
        %s271 = smul.addr %s270, 8
        %s272 = scalar_lea.vmem %s4, %s271
      $region48: #{residual_block.5} parent=43 // pred_fallthru
        _
    $region44: #{residual_block.5} parent=5 // pred_fallthru
      _
  $region6: #{residual_block.5} parent=0 // loop_footer
    %s14 = sadd.s32 1, %s10
  $region7: #{residual_block.5} parent=0 // loop_footer_branch
    %9 = sbr.rel target = $region3
  $region8: #{residual_block.5} parent=0 // loop_exit
    _

// kernel: residual_block.4
$region0: #{residual_block.4}
  #allocation0 [shape = 'u32[]', space=smem, size = 0x4, offset = 0x4, fixed_abs, tag = 'smem constant byte address 0x4 - core index']
  #allocation1 [shape = 'u32[144,128]{1,0:T(1,128)}', space=vmem, size = 0x12000, scoped, tag = 'internal scratch']
  %s0 = inlined_call_operand.vmem [shape: f32[32,128], index: 0, kind: input, shape index: {}]
  %s1 = inlined_call_operand.vmem [shape: f32[1,128], index: 1, kind: input, shape index: {}]
  %s2 = inlined_call_operand.vmem [shape: f32[1,128], index: 2, kind: input, shape index: {}]
  %s3 = inlined_call_operand.vmem [shape: bf16[3,128,128], index: 3, kind: input, shape index: {}]
  %s4 = inlined_call_operand.vmem [shape: f32[32,128], index: 4, kind: output, shape index: {0}]
  %s5 = inlined_call_operand.vmem [shape: f32[2,2,128], index: 5, kind: output, shape index: {1}]
  %6 = xla_tuple %s4, %s5
  %s7 = sld [smem:[#allocation0]]
  $region57: #{residual_block.4} parent=0
    _
  %s9 = ssub.s32 1, %s7
  %s10 = scalar_select 0, %s9, %s7
  loop: start=0, step=1, limit=4
  $region2: #{residual_block.4} parent=0 // loop_pre_header
    _
  $region3: #{residual_block.4} parent=0 // loop_header
    %s12 = sphi 0, %s16
    %p13 = scmp.ge.s32.totalorder %s12, 4
    %s22 = sphi 0, %s24
    %s25 = sphi 0, %s22
    %s26 = sphi 0, %s25
    %s42 = sphi 0, %s26
    %s46 = sphi 0, %s46
    %s48 = sphi 0, %s46
    %s49 = sphi 0, %s48
    %s63 = sphi 0, %s49
    %s67 = sphi 0, %s67
    %s69 = sphi 0, %s67
    %s70 = sphi 0, %s69
    %s84 = sphi 0, %s70
    %s88 = sphi 0, %s88
    %s90 = sphi 0, %s88
    %s91 = sphi 0, %s90
    %s105 = sphi 0, %s91
    %s111 = sphi 0, %s113
    %s114 = sphi 0, %s111
    %s115 = sphi 0, %s114
    %s131 = sphi 0, %s115
    %s137 = sphi 0, %s139
    %s140 = sphi 0, %s137
    %s141 = sphi 0, %s140
    %s157 = sphi 0, %s141
  $region4: #{residual_block.4} parent=0 // loop_header_branch
    %15 = sbr.rel (%p13) target = $region8
  $region5: #{residual_block.4} parent=0 // loop_body
    %s17 = ssub.s32 %s12, 1
    %s18 = ssub.s32 %s12, 2
    %s19 = sadd.s32 %s12, 1
    %s20 = ssub.s32 %s12, %s19
    %p21 = scmp.eq.s32.totalorder %s20, 0
    %s23 = sadd.s32 %s22, 1
    %s24 = scalar_select %p21, %s22, %s23
    %p27 = pneg %p21
    %p28 = scmp.eq.s32.totalorder %s12, 1
    %p29 = por %p27, %p28
    %p30 = scmp.ne.s32.totalorder %s22, %s25
    %p31 = scmp.eq.s32.totalorder %s12, 0
    %p32 = por %p30, %p31
    %p33 = scmp.ne.s32.totalorder %s22, %s25
    %p34 = scmp.eq.s32.totalorder %s17, 1
    %p35 = por %p33, %p34
    %p36 = scmp.ne.s32.totalorder %s25, %s26
    %p37 = scmp.eq.s32.totalorder %s17, 0
    %p38 = por %p36, %p37
    %p39 = scmp.ne.s32.totalorder %s25, %s26
    %p40 = scmp.eq.s32.totalorder %s18, 1
    %p41 = por %p39, %p40
    %p43 = scmp.ne.s32.totalorder %s26, %s42
    %p44 = scmp.eq.s32.totalorder %s18, 0
    %p45 = por %p43, %p44
    %s47 = sadd.s32 %s46, 1
    %p50 = scmp.eq.s32.totalorder %s12, 1
    %p51 = scmp.ne.s32.totalorder %s46, %s48
    %p52 = scmp.eq.s32.totalorder %s12, 0
    %p53 = por %p51, %p52
    %p54 = scmp.ne.s32.totalorder %s46, %s48
    %p55 = scmp.eq.s32.totalorder %s17, 1
    %p56 = por %p54, %p55
    %p57 = scmp.ne.s32.totalorder %s48, %s49
    %p58 = scmp.eq.s32.totalorder %s17, 0
    %p59 = por %p57, %p58
    %p60 = scmp.ne.s32.totalorder %s48, %s49
    %p61 = scmp.eq.s32.totalorder %s18, 1
    %p62 = por %p60, %p61
    %p64 = scmp.ne.s32.totalorder %s49, %s63
    %p65 = scmp.eq.s32.totalorder %s18, 0
    %p66 = por %p64, %p65
    %s68 = sadd.s32 %s67, 1
    %p71 = scmp.eq.s32.totalorder %s12, 1
    %p72 = scmp.ne.s32.totalorder %s67, %s69
    %p73 = scmp.eq.s32.totalorder %s12, 0
    %p74 = por %p72, %p73
    %p75 = scmp.ne.s32.totalorder %s67, %s69
    %p76 = scmp.eq.s32.totalorder %s17, 1
    %p77 = por %p75, %p76
    %p78 = scmp.ne.s32.totalorder %s69, %s70
    %p79 = scmp.eq.s32.totalorder %s17, 0
    %p80 = por %p78, %p79
    %p81 = scmp.ne.s32.totalorder %s69, %s70
    %p82 = scmp.eq.s32.totalorder %s18, 1
    %p83 = por %p81, %p82
    %p85 = scmp.ne.s32.totalorder %s70, %s84
    %p86 = scmp.eq.s32.totalorder %s18, 0
    %p87 = por %p85, %p86
    %s89 = sadd.s32 %s88, 1
    %p92 = scmp.eq.s32.totalorder %s12, 1
    %p93 = scmp.ne.s32.totalorder %s88, %s90
    %p94 = scmp.eq.s32.totalorder %s12, 0
    %p95 = por %p93, %p94
    %p96 = scmp.ne.s32.totalorder %s88, %s90
    %p97 = scmp.eq.s32.totalorder %s17, 1
    %p98 = por %p96, %p97
    %p99 = scmp.ne.s32.totalorder %s90, %s91
    %p100 = scmp.eq.s32.totalorder %s17, 0
    %p101 = por %p99, %p100
    %p102 = scmp.ne.s32.totalorder %s90, %s91
    %p103 = scmp.eq.s32.totalorder %s18, 1
    %p104 = por %p102, %p103
    %p106 = scmp.ne.s32.totalorder %s91, %s105
    %p107 = scmp.eq.s32.totalorder %s18, 0
    %p108 = por %p106, %p107
    %s109 = ssub.s32 %s12, %s19
    %p110 = scmp.eq.s32.totalorder %s109, 0
    %s112 = sadd.s32 %s111, 1
    %s113 = scalar_select %p110, %s111, %s112
    %p116 = pneg %p110
    %p117 = scmp.eq.s32.totalorder %s12, 1
    %p118 = por %p116, %p117
    %p119 = scmp.ne.s32.totalorder %s111, %s114
    %p120 = scmp.eq.s32.totalorder %s12, 0
    %p121 = por %p119, %p120
    %p122 = scmp.ne.s32.totalorder %s111, %s114
    %p123 = scmp.eq.s32.totalorder %s17, 1
    %p124 = por %p122, %p123
    %p125 = scmp.ne.s32.totalorder %s114, %s115
    %p126 = scmp.eq.s32.totalorder %s17, 0
    %p127 = por %p125, %p126
    %p128 = scmp.ne.s32.totalorder %s114, %s115
    %p129 = scmp.eq.s32.totalorder %s18, 1
    %p130 = por %p128, %p129
    %p132 = scmp.ne.s32.totalorder %s115, %s131
    %p133 = scmp.eq.s32.totalorder %s18, 0
    %p134 = por %p132, %p133
    %s135 = ssub.s32 %s12, %s19
    %p136 = scmp.eq.s32.totalorder %s135, 0
    %s138 = sadd.s32 %s137, 1
    %s139 = scalar_select %p136, %s137, %s138
    %p142 = pneg %p136
    %p143 = scmp.eq.s32.totalorder %s12, 1
    %p144 = por %p142, %p143
    %p145 = scmp.ne.s32.totalorder %s137, %s140
    %p146 = scmp.eq.s32.totalorder %s12, 0
    %p147 = por %p145, %p146
    %p148 = scmp.ne.s32.totalorder %s137, %s140
    %p149 = scmp.eq.s32.totalorder %s17, 1
    %p150 = por %p148, %p149
    %p151 = scmp.ne.s32.totalorder %s140, %s141
    %p152 = scmp.eq.s32.totalorder %s17, 0
    %p153 = por %p151, %p152
    %p154 = scmp.ne.s32.totalorder %s140, %s141
    %p155 = scmp.eq.s32.totalorder %s18, 1
    %p156 = por %p154, %p155
    %p158 = scmp.ne.s32.totalorder %s141, %s157
    %p159 = scmp.eq.s32.totalorder %s18, 0
    %p160 = por %p158, %p159
    %p161 = scmp.le.s32.totalorder 1, %s12
    %p162 = scmp.lt.s32.totalorder %s12, 3
    %p163 = pnand %p161, %p162
    %p164 = pneg %p163
    // Predicated region
    $region9: #{residual_block.4} parent=5 // pred_check
      _
    $region10: #{residual_block.4} parent=5 // pred_check_branch
      %166 = sbr.rel (%p163) target = $region12
    $region11: #{residual_block.4} parent=5 // pred_region
      %s167 = ssub.s32 %s12, 1
      // Predicated region
      $region13: #{residual_block.4} parent=11 // pred_check
        %p168 = pneg %p59
      $region14: #{residual_block.4} parent=11 // pred_check_branch
        %170 = sbr.rel (%p168) target = $region16
      $region15: #{residual_block.4} parent=11 // pred_region
        _
      $region16: #{residual_block.4} parent=11 // pred_fallthru
        _
      // Predicated region
      $region17: #{residual_block.4} parent=11 // pred_check
        %p171 = pneg %p80
      $region18: #{residual_block.4} parent=11 // pred_check_branch
        %173 = sbr.rel (%p171) target = $region20
      $region19: #{residual_block.4} parent=11 // pred_region
        _
      $region20: #{residual_block.4} parent=11 // pred_fallthru
        _
      // Predicated region
      $region21: #{residual_block.4} parent=11 // pred_check
        %p174 = pneg %p101
      $region22: #{residual_block.4} parent=11 // pred_check_branch
        %176 = sbr.rel (%p174) target = $region24
      $region23: #{residual_block.4} parent=11 // pred_region
        _
      $region24: #{residual_block.4} parent=11 // pred_fallthru
        _
    $region12: #{residual_block.4} parent=5 // pred_fallthru
      _
    %p177 = scmp.lt.s32.totalorder %s12, 2
    // Predicated region
    $region25: #{residual_block.4} parent=5 // pred_check
      %p178 = pneg %p177
    $region26: #{residual_block.4} parent=5 // pred_check_branch
      %180 = sbr.rel (%p178) target = $region28
    $region27: #{residual_block.4} parent=5 // pred_region
      // Predicated region
      $region29: #{residual_block.4} parent=27 // pred_check
        %p181 = pneg %p32
      $region30: #{residual_block.4} parent=27 // pred_check_branch
        %183 = sbr.rel (%p181) target = $region32
      $region31: #{residual_block.4} parent=27 // pred_region
        %s184 = smul.u32 2, %s12
        %p185 = scmp.lt.s32.totalorder %s184, 3
        %s186 = scalar_select %p185, %s184, 3
        %s187 = smul.addr %s186, 8
        %s188 = scalar_lea.vmem %s0, %s187
        %s189 = smul.u32 2, %s12
      $region32: #{residual_block.4} parent=27 // pred_fallthru
        _
    $region28: #{residual_block.4} parent=5 // pred_fallthru
      _
    %p190 = scmp.le.s32.totalorder 1, %s12
    %p191 = scmp.lt.s32.totalorder %s12, 3
    %p192 = pnand %p190, %p191
    %p193 = pneg %p192
    // Predicated region
    $region33: #{residual_block.4} parent=5 // pred_check
      _
    $region34: #{residual_block.4} parent=5 // pred_check_branch
      %195 = sbr.rel (%p192) target = $region36
    $region35: #{residual_block.4} parent=5 // pred_region
      %s196 = ssub.s32 %s12, 1
      %s197 = smul.u32 2, %s17
      %p198 = scmp.lt.s32.totalorder %s197, 3
      %s199 = scalar_select %p198, %s197, 3
      %s200 = smul.addr %s199, 8
      %s201 = scalar_lea.vmem %s0, %s200
      %p202 = pneg %p38
      %p203 = pneg %p35
      %p204 = pneg %p59
      %p205 = pneg %p56
      %p206 = pneg %p80
      %p207 = pneg %p77
      %p208 = pneg %p101
      %p209 = pneg %p98
      %p210 = pneg %p127
      %p211 = pneg %p124
      %s212 = smul.u32 2, %s17
      %p213 = scmp.lt.s32.totalorder %s212, 3
      %s214 = scalar_select %p213, %s212, 3
      %s215 = smul.addr %s214, 8
      %s216 = scalar_lea.vmem %s4, %s215
      %p217 = pneg %p153
      %p218 = pneg %p150
      %p219 = scmp.lt.s32.totalorder %s17, 1
      %s220 = scalar_select %p219, %s17, 1
      %s221 = smul.addr %s220, 2
      %s222 = scalar_lea.vmem %s5, %s221
      %s223 = smul.u32 2, %s17
      %p224 = scmp.lt.s32.totalorder %s223, 3
      %s225 = scalar_select %p224, %s223, 3
      %s226 = smul.addr %s225, 8
      %s227 = scalar_lea.vmem %s0, %s226
      %s228 = smul.u32 2, %s17
      %s229 = smul.u32 2, %s17
      %p230 = scmp.lt.s32.totalorder %s229, 3
      %s231 = scalar_select %p230, %s229, 3
      %s232 = smul.addr %s231, 8
      %s233 = scalar_lea.vmem %s4, %s232
      %s234 = smul.u32 2, %s17
      %p235 = scmp.lt.s32.totalorder %s17, 1
      %s236 = scalar_select %p235, %s17, 1
      %s237 = smul.addr %s236, 2
      %s238 = scalar_lea.vmem %s5, %s237
      %v240 = vld [vmem:[%s227] sm:$0xff]
      %v241 = vld [vmem:[%s227 + $0x8] sm:$0xff]
      %v242 = vld [vmem:[%s1] sm:$0x1]
      %v244 = vlaneseq
      %v245 = vshrl.u32 %v244, 7
      %v246 = vsub.s32 0, %v245
      %v247 = vrot.slane %v242, %v246
      %v249 = vmul.f32 %v240, %v247
      %v250 = vmul.f32 %v241, %v247
      %v251 = vld [vmem:[%s2] sm:$0x1]
      %v253 = vlaneseq
      %v254 = vshrl.u32 %v253, 7
      %v255 = vsub.s32 0, %v254
      %v256 = vrot.slane %v251, %v255
      %v258 = vadd.f32 %v249, %v256
      %v259 = vadd.f32 %v250, %v256
      %v260 = vmax.f32 %v258, 0.0
      %v261 = vmax.f32 %v259, 0.0
      %vm264 = vcmask 1040384
      %v265 = vrot.slane %v260, 7
      %v266 = vrot.slane %v261, 7
      %v267 = vsel %vm264, %v265, %v266
      %v270 = vsel %vm264, 0.0, %v265
      %vm271 = vcmask 1046528
      %v272 = vrot.slane %v260, 1
      %v273 = vrot.slane %v261, 1
      %v274 = vsel %vm271, %v272, %v273
      %v277 = vsel %vm271, %v273, 0.0
      %v278 = vpack.c.bf16 %v267, %v270
      %v279 = vld [vmem:[%s3] sm:$0xf]
      %v280 = vld [vmem:[%s3 + $0x4] sm:$0xf]
      %v281 = vld [vmem:[%s3 + $0x8] sm:$0xf]
      %v282 = vld [vmem:[%s3 + $0xc] sm:$0xf]
      %v283 = vld [vmem:[%s3 + $0x10] sm:$0xf]
      %v284 = vld [vmem:[%s3 + $0x14] sm:$0xf]
      %v285 = vld [vmem:[%s3 + $0x18] sm:$0xf]
      %v286 = vld [vmem:[%s3 + $0x1c] sm:$0xf]
      %v287 = vld [vmem:[%s3 + $0x20] sm:$0xf]
      %v288 = vld [vmem:[%s3 + $0x24] sm:$0xf]
      %v289 = vld [vmem:[%s3 + $0x28] sm:$0xf]
      %v290 = vld [vmem:[%s3 + $0x2c] sm:$0xf]
      %v291 = vld [vmem:[%s3 + $0x30] sm:$0xf]
      %v292 = vld [vmem:[%s3 + $0x34] sm:$0xf]
      %v293 = vld [vmem:[%s3 + $0x38] sm:$0xf]
      %v294 = vld [vmem:[%s3 + $0x3c] sm:$0xf]
      %v295 = vpack.c.bf16 %v261, %v260
      %s296 = scalar_lea.vmem %s3, 64
      %v297 = vld [vmem:[%s296] sm:$0xf]
      %v298 = vld [vmem:[%s296 + $0x4] sm:$0xf]
      %v299 = vld [vmem:[%s296 + $0x8] sm:$0xf]
      %v300 = vld [vmem:[%s296 + $0xc] sm:$0xf]
      %v301 = vld [vmem:[%s296 + $0x10] sm:$0xf]
      %v302 = vld [vmem:[%s296 + $0x14] sm:$0xf]
      %v303 = vld [vmem:[%s296 + $0x18] sm:$0xf]
      %v304 = vld [vmem:[%s296 + $0x1c] sm:$0xf]
      %v305 = vld [vmem:[%s296 + $0x20] sm:$0xf]
      %v306 = vld [vmem:[%s296 + $0x24] sm:$0xf]
      %v307 = vld [vmem:[%s296 + $0x28] sm:$0xf]
      %v308 = vld [vmem:[%s296 + $0x2c] sm:$0xf]
      %v309 = vld [vmem:[%s296 + $0x30] sm:$0xf]
      %v310 = vld [vmem:[%s296 + $0x34] sm:$0xf]
      %v311 = vld [vmem:[%s296 + $0x38] sm:$0xf]
      %v312 = vld [vmem:[%s296 + $0x3c] sm:$0xf]
      %v329 = vunpack.c.l.b16 %v297
      %v330 = vunpack.c.l.b16 %v298
      %v331 = vunpack.c.l.b16 %v299
      %v332 = vunpack.c.l.b16 %v300
      %v333 = vunpack.c.l.b16 %v301
      %v334 = vunpack.c.l.b16 %v302
      %v335 = vunpack.c.l.b16 %v303
      %v336 = vunpack.c.l.b16 %v304
      %v337 = vunpack.c.l.b16 %v305
      %v338 = vunpack.c.l.b16 %v306
      %v339 = vunpack.c.l.b16 %v307
      %v340 = vunpack.c.l.b16 %v308
      %v341 = vunpack.c.l.b16 %v309
      %v342 = vunpack.c.l.b16 %v310
      %v343 = vunpack.c.l.b16 %v311
      %v344 = vunpack.c.l.b16 %v312
      %v345 = vpack.c.b16 %v330, %v329
      %v346 = vpack.c.b16 %v332, %v331
      %v347 = vpack.c.b16 %v334, %v333
      %v348 = vpack.c.b16 %v336, %v335
      %v349 = vpack.c.b16 %v338, %v337
      %v350 = vpack.c.b16 %v340, %v339
      %v351 = vpack.c.b16 %v342, %v341
      %v352 = vpack.c.b16 %v344, %v343
      %361 = vmatprep.subr.bf16.mxu0 0
      %362 = vmatpush1.bf16.msra.mxu0 %v352
      %363 = vmatprep.subr.bf16.mxu0 0
      %364 = vmatpush1.bf16.msra.mxu0 %v351
      %365 = vmatprep.subr.bf16.mxu0 0
      %366 = vmatpush1.bf16.msra.mxu0 %v350
      %367 = vmatprep.subr.bf16.mxu0 0
      %368 = vmatpush1.bf16.msra.mxu0 %v349
      %369 = vmatprep.subr.bf16.mxu0 0
      %370 = vmatpush1.bf16.msra.mxu0 %v348
      %371 = vmatprep.subr.bf16.mxu0 0
      %372 = vmatpush1.bf16.msra.mxu0 %v347
      %373 = vmatprep.subr.bf16.mxu0 0
      %374 = vmatpush1.bf16.msra.mxu0 %v346
      %375 = vmatprep.subr.bf16.mxu0 0
      %376 = vmatpush1.bf16.msra.mxu0 %v345
      %377 = vmatprep.subr.bf16.mxu0 0
      %378 = vmatpush2.bf16.msra.mxu0 0
      %379 = vmatprep.subr.bf16.mxu0 0
      %380 = vmatpush2.bf16.msra.mxu0 0
      %381 = vmatprep.subr.bf16.mxu0 0
      %382 = vmatpush2.bf16.msra.mxu0 0
      %383 = vmatprep.subr.bf16.mxu0 0
      %384 = vmatpush2.bf16.msra.mxu0 0
      %385 = vmatprep.subr.bf16.mxu0 0
      %386 = vmatpush2.bf16.msra.mxu0 0
      %387 = vmatprep.subr.bf16.mxu0 0
      %388 = vmatpush2.bf16.msra.mxu0 0
      %389 = vmatprep.subr.bf16.mxu0 0
      %390 = vmatpush2.bf16.msra.mxu0 0
      %391 = vmatprep.subr.bf16.mxu0 0
      %392 = vmatpush2.bf16.msra.mxu0 0
      %393 = vmatprep.mubr.bf16.mxu0 0
      %394 = vmatmul.mubr.bf16.gmra.mxu0 %v295
      %v395 = vpop.f32.mrf.mxu0
      %v396 = vadd.f32 0.0, %v395
      %v397 = vpop.f32.mrf.mxu0
      %v398 = vpop.f32.mrf.mxu0
      %v399 = vadd.f32 0.0, %v398
      %v400 = vpop.f32.mrf.mxu0
      %401 = vdwg.mxu0
      %v418 = vunpack.c.l.b16 %v279
      %v419 = vunpack.c.l.b16 %v280
      %v420 = vunpack.c.l.b16 %v281
      %v421 = vunpack.c.l.b16 %v282
      %v422 = vunpack.c.l.b16 %v283
      %v423 = vunpack.c.l.b16 %v284
      %v424 = vunpack.c.l.b16 %v285
      %v425 = vunpack.c.l.b16 %v286
      %v426 = vunpack.c.l.b16 %v287
      %v427 = vunpack.c.l.b16 %v288
      %v428 = vunpack.c.l.b16 %v289
      %v429 = vunpack.c.l.b16 %v290
      %v430 = vunpack.c.l.b16 %v291
      %v431 = vunpack.c.l.b16 %v292
      %v432 = vunpack.c.l.b16 %v293
      %v433 = vunpack.c.l.b16 %v294
      %v434 = vpack.c.b16 %v419, %v418
      %v435 = vpack.c.b16 %v421, %v420
      %v436 = vpack.c.b16 %v423, %v422
      %v437 = vpack.c.b16 %v425, %v424
      %v438 = vpack.c.b16 %v427, %v426
      %v439 = vpack.c.b16 %v429, %v428
      %v440 = vpack.c.b16 %v431, %v430
      %v441 = vpack.c.b16 %v433, %v432
      %450 = vmatprep.subr.bf16.mxu0 0
      %451 = vmatpush1.bf16.msra.mxu0 %v441
      %452 = vmatprep.subr.bf16.mxu0 0
      %453 = vmatpush1.bf16.msra.mxu0 %v440
      %454 = vmatprep.subr.bf16.mxu0 0
      %455 = vmatpush1.bf16.msra.mxu0 %v439
      %456 = vmatprep.subr.bf16.mxu0 0
      %457 = vmatpush1.bf16.msra.mxu0 %v438
      %458 = vmatprep.subr.bf16.mxu0 0
      %459 = vmatpush1.bf16.msra.mxu0 %v437
      %460 = vmatprep.subr.bf16.mxu0 0
      %461 = vmatpush1.bf16.msra.mxu0 %v436
      %462 = vmatprep.subr.bf16.mxu0 0
      %463 = vmatpush1.bf16.msra.mxu0 %v435
      %464 = vmatprep.subr.bf16.mxu0 0
      %465 = vmatpush1.bf16.msra.mxu0 %v434
      %466 = vmatprep.subr.bf16.mxu0 0
      %467 = vmatpush2.bf16.msra.mxu0 0
      %468 = vmatprep.subr.bf16.mxu0 0
      %469 = vmatpush2.bf16.msra.mxu0 0
      %470 = vmatprep.subr.bf16.mxu0 0
      %471 = vmatpush2.bf16.msra.mxu0 0
      %472 = vmatprep.subr.bf16.mxu0 0
      %473 = vmatpush2.bf16.msra.mxu0 0
      %474 = vmatprep.subr.bf16.mxu0 0
      %475 = vmatpush2.bf16.msra.mxu0 0
      %476 = vmatprep.subr.bf16.mxu0 0
      %477 = vmatpush2.bf16.msra.mxu0 0
      %478 = vmatprep.subr.bf16.mxu0 0
      %479 = vmatpush2.bf16.msra.mxu0 0
      %480 = vmatprep.subr.bf16.mxu0 0
      %481 = vmatpush2.bf16.msra.mxu0 0
      %482 = vmatprep.mubr.bf16.mxu0 0
      %483 = vmatmul.mubr.bf16.gmra.mxu0 %v278
      %v484 = vpop.f32.mrf.mxu0
      %v485 = vadd.f32 %v396, %v484
      %v486 = vpop.f32.mrf.mxu0
      %v487 = vpop.f32.mrf.mxu0
      %v488 = vadd.f32 %v399, %v487
      %v489 = vpop.f32.mrf.mxu0
      %490 = vdwg.mxu0
      %v491 = vpack.c.bf16 %v277, %v274
      %s492 = scalar_lea.vmem %s3, 128
      %v493 = vld [vmem:[%s492] sm:$0xf]
      %v494 = vld [vmem:[%s492 + $0x4] sm:$0xf]
      %v495 = vld [vmem:[%s492 + $0x8] sm:$0xf]
      %v496 = vld [vmem:[%s492 + $0xc] sm:$0xf]
      %v497 = vld [vmem:[%s492 + $0x10] sm:$0xf]
      %v498 = vld [vmem:[%s492 + $0x14] sm:$0xf]
      %v499 = vld [vmem:[%s492 + $0x18] sm:$0xf]
      %v500 = vld [vmem:[%s492 + $0x1c] sm:$0xf]
      %v501 = vld [vmem:[%s492 + $0x20] sm:$0xf]
      %v502 = vld [vmem:[%s492 + $0x24] sm:$0xf]
      %v503 = vld [vmem:[%s492 + $0x28] sm:$0xf]
      %v504 = vld [vmem:[%s492 + $0x2c] sm:$0xf]
      %v505 = vld [vmem:[%s492 + $0x30] sm:$0xf]
      %v506 = vld [vmem:[%s492 + $0x34] sm:$0xf]
      %v507 = vld [vmem:[%s492 + $0x38] sm:$0xf]
      %v508 = vld [vmem:[%s492 + $0x3c] sm:$0xf]
      %v525 = vunpack.c.l.b16 %v493
      %v526 = vunpack.c.l.b16 %v494
      %v527 = vunpack.c.l.b16 %v495
      %v528 = vunpack.c.l.b16 %v496
      %v529 = vunpack.c.l.b16 %v497
      %v530 = vunpack.c.l.b16 %v498
      %v531 = vunpack.c.l.b16 %v499
      %v532 = vunpack.c.l.b16 %v500
      %v533 = vunpack.c.l.b16 %v501
      %v534 = vunpack.c.l.b16 %v502
      %v535 = vunpack.c.l.b16 %v503
      %v536 = vunpack.c.l.b16 %v504
      %v537 = vunpack.c.l.b16 %v505
      %v538 = vunpack.c.l.b16 %v506
      %v539 = vunpack.c.l.b16 %v507
      %v540 = vunpack.c.l.b16 %v508
      %v541 = vpack.c.b16 %v526, %v525
      %v542 = vpack.c.b16 %v528, %v527
      %v543 = vpack.c.b16 %v530, %v529
      %v544 = vpack.c.b16 %v532, %v531
      %v545 = vpack.c.b16 %v534, %v533
      %v546 = vpack.c.b16 %v536, %v535
      %v547 = vpack.c.b16 %v538, %v537
      %v548 = vpack.c.b16 %v540, %v539
      %557 = vmatprep.subr.bf16.mxu0 0
      %558 = vmatpush1.bf16.msra.mxu0 %v548
      %559 = vmatprep.subr.bf16.mxu0 0
      %560 = vmatpush1.bf16.msra.mxu0 %v547
      %561 = vmatprep.subr.bf16.mxu0 0
      %562 = vmatpush1.bf16.msra.mxu0 %v546
      %563 = vmatprep.subr.bf16.mxu0 0
      %564 = vmatpush1.bf16.msra.mxu0 %v545
      %565 = vmatprep.subr.bf16.mxu0 0
      %566 = vmatpush1.bf16.msra.mxu0 %v544
      %567 = vmatprep.subr.bf16.mxu0 0
      %568 = vmatpush1.bf16.msra.mxu0 %v543
      %569 = vmatprep.subr.bf16.mxu0 0
      %570 = vmatpush1.bf16.msra.mxu0 %v542
      %571 = vmatprep.subr.bf16.mxu0 0
      %572 = vmatpush1.bf16.msra.mxu0 %v541
      %573 = vmatprep.subr.bf16.mxu0 0
      %574 = vmatpush2.bf16.msra.mxu0 0
      %575 = vmatprep.subr.bf16.mxu0 0
      %576 = vmatpush2.bf16.msra.mxu0 0
      %577 = vmatprep.subr.bf16.mxu0 0
      %578 = vmatpush2.bf16.msra.mxu0 0
      %579 = vmatprep.subr.bf16.mxu0 0
      %580 = vmatpush2.bf16.msra.mxu0 0
      %581 = vmatprep.subr.bf16.mxu0 0
      %582 = vmatpush2.bf16.msra.mxu0 0
      %583 = vmatprep.subr.bf16.mxu0 0
      %584 = vmatpush2.bf16.msra.mxu0 0
      %585 = vmatprep.subr.bf16.mxu0 0
      %586 = vmatpush2.bf16.msra.mxu0 0
      %587 = vmatprep.subr.bf16.mxu0 0
      %588 = vmatpush2.bf16.msra.mxu0 0
      %589 = vmatprep.mubr.bf16.mxu0 0
      %590 = vmatmul.mubr.bf16.gmra.mxu0 %v491
      %v591 = vpop.f32.mrf.mxu0
      %v592 = vadd.f32 0.0, %v591
      %v593 = vpop.f32.mrf.mxu0
      %v594 = vpop.f32.mrf.mxu0
      %v595 = vadd.f32 0.0, %v594
      %v596 = vpop.f32.mrf.mxu0
      %597 = vdwg.mxu0
      %v598 = vadd.f32 %v485, %v592
      %v599 = vadd.f32 %v488, %v595
      %600 = vst [vmem:[%s233] sm:$0xff] %v598
      %601 = vst [vmem:[%s233 + $0x8] sm:$0xff] %v599
      %v602 = vadd.f32 %v598, %v599
      %v603 = vrot.slane %v602, 4
      %v604 = vadd.f32 %v602, %v603
      %v605 = vrot.slane %v604, 2
      %v606 = vadd.f32 %v604, %v605
      %v607 = vrot.slane %v606, 1
      %v608 = vadd.f32 %v606, %v607
      %v609 = vmul.f32 %v598, %v598
      %v610 = vmul.f32 %v599, %v599
      %v611 = vadd.f32 %v609, %v610
      %v612 = vrot.slane %v611, 4
      %v613 = vadd.f32 %v611, %v612
      %v614 = vrot.slane %v613, 2
      %v615 = vadd.f32 %v613, %v614
      %v616 = vrot.slane %v615, 1
      %v617 = vadd.f32 %v615, %v616
      %v618 = vsel %vm264, %v608, %v617
      %619 = vst [vmem:[%s238] sm:$0x3] %v618
      %s620 = smul.u32 2, %s17
      %p621 = scmp.lt.s32.totalorder %s620, 3
      %s622 = scalar_select %p621, %s620, 3
      %s623 = smul.addr %s622, 8
      %s624 = scalar_lea.vmem %s4, %s623
      %p625 = scmp.lt.s32.totalorder %s17, 1
      %s626 = scalar_select %p625, %s17, 1
      %s627 = smul.addr %s626, 2
      %s628 = scalar_lea.vmem %s5, %s627
      // Predicated region
      $region37: #{residual_block.4} parent=35 // pred_check
        %p629 = pneg %p124
      $region38: #{residual_block.4} parent=35 // pred_check_branch
        %631 = sbr.rel (%p629) target = $region40
      $region39: #{residual_block.4} parent=35 // pred_region
        %s632 = smul.u32 2, %s17
      $region40: #{residual_block.4} parent=35 // pred_fallthru
        _
      // Predicated region
      $region41: #{residual_block.4} parent=35 // pred_check
        %p633 = pneg %p150
      $region42: #{residual_block.4} parent=35 // pred_check_branch
        %635 = sbr.rel (%p633) target = $region44
      $region43: #{residual_block.4} parent=35 // pred_region
        _
      $region44: #{residual_block.4} parent=35 // pred_fallthru
        _
    $region36: #{residual_block.4} parent=5 // pred_fallthru
      _
    %p636 = scmp.le.s32.totalorder 2, %s12
    // Predicated region
    $region45: #{residual_block.4} parent=5 // pred_check
      %p637 = pneg %p636
    $region46: #{residual_block.4} parent=5 // pred_check_branch
      %639 = sbr.rel (%p637) target = $region48
    $region47: #{residual_block.4} parent=5 // pred_region
      %s640 = ssub.s32 %s12, 2
      // Predicated region
      $region49: #{residual_block.4} parent=47 // pred_check
        %p641 = pneg %p130
      $region50: #{residual_block.4} parent=47 // pred_check_branch
        %643 = sbr.rel (%p641) target = $region52
      $region51: #{residual_block.4} parent=47 // pred_region
        %s644 = smul.u32 2, %s18
        %p645 = scmp.lt.s32.totalorder %s644, 3
        %s646 = scalar_select %p645, %s644, 3
        %s647 = smul.addr %s646, 8
        %s648 = scalar_lea.vmem %s4, %s647
      $region52: #{residual_block.4} parent=47 // pred_fallthru
        _
      // Predicated region
      $region53: #{residual_block.4} parent=47 // pred_check
        %p649 = pneg %p156
      $region54: #{residual_block.4} parent=47 // pred_check_branch
        %651 = sbr.rel (%p649) target = $region56
      $region55: #{residual_block.4} parent=47 // pred_region
        %p652 = scmp.lt.s32.totalorder %s18, 1
        %s653 = scalar_select %p652, %s18, 1
        %s654 = smul.addr %s653, 2
        %s655 = scalar_lea.vmem %s5, %s654
      $region56: #{residual_block.4} parent=47 // pred_fallthru
        _
    $region48: #{residual_block.4} parent=5 // pred_fallthru
      _
  $region6: #{residual_block.4} parent=0 // loop_footer
    %s16 = sadd.s32 1, %s12
  $region7: #{residual_block.4} parent=0 // loop_footer_branch
    %11 = sbr.rel target = $region3
  $region8: #{residual_block.4} parent=0 // loop_exit
    _

</llo_original>
